<compile_context>
chip_gen: v5e
topology: v5e:2x2
jax: 0.10.0
libtpu: 0.0.40
codegen_flags: <defaults>
</compile_context>

<pallas_src>
import functools

import jax
import jax.numpy as jnp
from jax import lax
from jax.experimental import pallas as pl
from jax.experimental.pallas import tpu as pltpu


# ----------------------------------------------------------------------------
# Parameter setup (deterministic, matches _fspecial_gauss_1d)
# ----------------------------------------------------------------------------
def _fspecial_gauss_1d(size: int, sigma: float) -> jnp.ndarray:
    coords = jnp.arange(size, dtype=jnp.float32) - (size // 2)
    g = jnp.exp(-(coords ** 2) / (2.0 * sigma ** 2))
    return g / jnp.sum(g)


def _conv_matrix(g: jnp.ndarray, n: int) -> jnp.ndarray:
    """Build (n, n_out) matrix so that (A @ M)[..., j] = sum_k g[k]*A[..., j+k]
    i.e. a VALID 1-D correlation along the contracted axis."""
    win = g.shape[0]
    n_out = n - win + 1
    i = jnp.arange(n)[:, None]
    j = jnp.arange(n_out)[None, :]
    k = i - j
    valid = (k >= 0) & (k < win)
    return jnp.where(valid, g[jnp.clip(k, 0, win - 1)], 0.0).astype(jnp.float32)


# ----------------------------------------------------------------------------
# Pallas kernel: fused blur matmuls + elementwise SSIM + per-block partial sum
# ----------------------------------------------------------------------------
def _ssim_kernel(x_ref, y_ref, gw_ref, ght_ref, out_ref, *, C1, C2):
    # x_ref / y_ref : (TB, H, W)    f32 tile in VMEM
    # gw_ref        : (W, Wout)     f32
    # ght_ref       : (Hout, H)     f32  (transposed H-blur matrix)
    # out_ref       : (1, 1, 128)   f32  per-program partial sum (broadcast)
    x = x_ref[...]
    y = y_ref[...]
    gw = gw_ref[...]
    ght = ght_ref[...]

    TB, H, W = x.shape
    Wout = gw.shape[1]
    Hout = ght.shape[0]
    M = 5 * TB

    # --- fused blur of the five moment maps -------------------------------
    # stack [x, y, x*x, y*y, x*y] along the batch axis -> 2 matmuls total
    s = jnp.concatenate([x, y, x * x, y * y, x * y], axis=0)      # (5TB, H, W)

    # W-direction blur: one 2-D MXU matmul with M = 5*TB*H (lane-dense /
    # high MXU occupancy) when the flatten is tile-preserving.
    if H % 8 == 0:
        t = jnp.dot(s.reshape(M * H, W), gw,
                    preferred_element_type=jnp.float32)           # (5TB*H, Wout)
        t = t.reshape(M, H, Wout)
    else:
        t = jnp.einsum("bhw,wj->bhj", s, gw,
                       preferred_element_type=jnp.float32)        # (5TB, H, Wout)

    # H-direction blur: contraction over the LAST dim of ght and dim-1 of t,
    # output kept in the natural dot_general order (b, Wout, Hout) so Mosaic
    # needs no output transpose.  The ssim map layout is irrelevant because
    # only its spatial sum is used.
    blurred = jnp.einsum("bhw,ih->bwi", t, ght,
                         preferred_element_type=jnp.float32)      # (5TB, Wout, Hout)

    mu1 = blurred[0 * TB:1 * TB]
    mu2 = blurred[1 * TB:2 * TB]
    xx = blurred[2 * TB:3 * TB]
    yy = blurred[3 * TB:4 * TB]
    xy = blurred[4 * TB:5 * TB]

    mu1_sq = mu1 * mu1
    mu2_sq = mu2 * mu2
    mu1_mu2 = mu1 * mu2

    sigma1_sq = xx - mu1_sq
    sigma2_sq = yy - mu2_sq
    sigma12 = xy - mu1_mu2

    cs_num = 2.0 * sigma12 + C2
    cs_den = sigma1_sq + sigma2_sq + C2
    l_num = 2.0 * mu1_mu2 + C1
    l_den = mu1_sq + mu2_sq + C1

    # divides -> exact reciprocals * numerators (approx=True is too loose for
    # the 1e-4 tolerance check)
    ssim_map = (l_num * cs_num) * (pl.reciprocal(l_den) * pl.reciprocal(cs_den))

    partial = jnp.sum(ssim_map)                                   # scalar
    out_ref[...] = jnp.broadcast_to(partial, (1, 1, 128)).astype(jnp.float32)


# ----------------------------------------------------------------------------
# Tile-size selection (conservative: fits v7x 64 MiB physical VMEM easily)
# ----------------------------------------------------------------------------
def _choose_tile_b(B: int, H: int, W: int, budget_bytes: int) -> int:
    # rough per-image VMEM footprint (f32): double-buffered x/y blocks,
    # 5-way stacked maps, W-blur intermediate, blurred maps + elementwise temps
    per_b = 4 * (4 * H * W + 5 * H * W + 5 * H * W + 13 * H * W)   # ~108*H*W B
    cap = max(1, min(B, budget_bytes // max(per_b, 1)))
    for tb in range(cap, 0, -1):
        if B % tb == 0:
            return tb
    return 1


# ----------------------------------------------------------------------------
# Wrapper
# ----------------------------------------------------------------------------
class SSIM:
    def __init__(self, data_range=255.0, size_average=True, win_size=11,
                 win_sigma=1.5, channel=3, spatial_dims=2,
                 K=(0.01, 0.03), nonnegative_ssim=False, tile_b=None):
        assert spatial_dims == 2, "only 2-D (NCHW) inputs supported"
        assert win_size % 2 == 1, "Window size should be odd."
        assert size_average, "only size_average=True is implemented"
        assert not nonnegative_ssim, "nonnegative_ssim not implemented"
        self.win_size = win_size
        self.win = _fspecial_gauss_1d(win_size, win_sigma)  # (win_size,)
        self.data_range = float(data_range)
        self.K = K
        self.channel = channel
        self.tile_b = tile_b  # optional override of the batch tile size

    def __call__(self, X: jnp.ndarray, Y: jnp.ndarray) -> jnp.ndarray:
        assert X.shape == Y.shape and X.ndim == 4, (X.shape, Y.shape)
        N, C, H, W = X.shape
        assert H >= self.win_size and W >= self.win_size, \
            "spatial dims must be >= win_size (blur not skipped in kernel)"

        K1, K2 = self.K
        C1 = (K1 * self.data_range) ** 2
        C2 = (K2 * self.data_range) ** 2

        B = N * C
        Hout = H - self.win_size + 1
        Wout = W - self.win_size + 1

        x2d = X.reshape(B, H, W).astype(jnp.float32)
        y2d = Y.reshape(B, H, W).astype(jnp.float32)
        gw = _conv_matrix(self.win, W)        # (W, Wout)
        ght = _conv_matrix(self.win, H).T     # (Hout, H)  pre-transposed

        tb = self.tile_b if self.tile_b is not None else \
            _choose_tile_b(B, H, W, 12 * 1024 * 1024)
        assert B % tb == 0, (B, tb)
        grid_b = B // tb

        kernel = functools.partial(_ssim_kernel, C1=C1, C2=C2)

        flops = int(2 * 5 * B * H * W * Wout        # W-direction blur
                    + 2 * 5 * B * Wout * Hout * H   # H-direction blur
                    + 15 * B * Hout * Wout)         # elementwise SSIM math
        bytes_accessed = int(4 * (2 * B * H * W + grid_b * 128
                                  + W * Wout + H * Hout))

        partials = pl.pallas_call(
            kernel,
            out_shape=jax.ShapeDtypeStruct((grid_b, 1, 128), jnp.float32),
            grid=(grid_b,),
            in_specs=[
                pl.BlockSpec((tb, H, W), lambda b: (b, 0, 0)),
                pl.BlockSpec((tb, H, W), lambda b: (b, 0, 0)),
                pl.BlockSpec((W, Wout), lambda b: (0, 0)),
                pl.BlockSpec((Hout, H), lambda b: (0, 0)),
            ],
            out_specs=pl.BlockSpec((1, 1, 128), lambda b: (b, 0, 0)),
            compiler_params=pltpu.CompilerParams(
                dimension_semantics=("parallel",),
                vmem_limit_bytes=32 * 1024 * 1024),
            cost_estimate=pl.CostEstimate(
                flops=flops, transcendentals=0, bytes_accessed=bytes_accessed),
        )(x2d, y2d, gw, ght)

        # size_average=True: mean over channels of spatial means == total sum
        # divided by B*Hout*Wout (every channel has the same element count).
        return jnp.sum(partials[:, 0, 0]) / float(B * Hout * Wout)


# ----------------------------------------------------------------------------
# Pure-JAX reference (mirrors the torch grouped-conv implementation)
# ----------------------------------------------------------------------------
def _gaussian_filter_ref(x, g):
    C = x.shape[1]
    dn = ("NCHW", "OIHW", "NCHW")
    wh = jnp.tile(g.reshape(1, 1, -1, 1), (C, 1, 1, 1))
    ww = jnp.tile(g.reshape(1, 1, 1, -1), (C, 1, 1, 1))
    x = lax.conv_general_dilated(x, wh, (1, 1), "VALID",
                                 dimension_numbers=dn, feature_group_count=C)
    x = lax.conv_general_dilated(x, ww, (1, 1), "VALID",
                                 dimension_numbers=dn, feature_group_count=C)
    return x


def _ssim_ref(X, Y, g, data_range=255.0, K=(0.01, 0.03)):
    K1, K2 = K
    C1 = (K1 * data_range) ** 2
    C2 = (K2 * data_range) ** 2
    mu1 = _gaussian_filter_ref(X, g)
    mu2 = _gaussian_filter_ref(Y, g)
    mu1_sq, mu2_sq, mu1_mu2 = mu1 ** 2, mu2 ** 2, mu1 * mu2
    sigma1_sq = _gaussian_filter_ref(X * X, g) - mu1_sq
    sigma2_sq = _gaussian_filter_ref(Y * Y, g) - mu2_sq
    sigma12 = _gaussian_filter_ref(X * Y, g) - mu1_mu2
    cs_map = (2 * sigma12 + C2) / (sigma1_sq + sigma2_sq + C2)
    ssim_map = (2 * mu1_mu2 + C1) / (mu1_sq + mu2_sq + C1) * cs_map
    ssim_pc = ssim_map.reshape(X.shape[0], X.shape[1], -1).mean(-1)
    return ssim_pc.mean()


# ----------------------------------------------------------------------------
if __name__ == "__main__":
    key = jax.random.PRNGKey(0)
    kx, ky = jax.random.split(key)
    N, C, H, W = 2, 3, 16, 16
    X = jax.random.uniform(kx, (N, C, H, W), jnp.float32) * 255.0
    Y = jnp.clip(X + 10.0 * jax.random.normal(ky, (N, C, H, W), jnp.float32),
                 0.0, 255.0)

    # tile_b=3 -> B = N*C = 6 split into a 2-step grid, exercising the
    # pipelined "parallel" batch axis and the partial-sum reduction path.
    mod = SSIM(data_range=255.0, size_average=True, win_size=11,
               win_sigma=1.5, channel=C, spatial_dims=2, tile_b=3)
    out = jax.block_until_ready(mod(X, Y))

    ref = jax.block_until_ready(_ssim_ref(X, Y, mod.win))
    assert jnp.allclose(out, ref, rtol=1e-4, atol=1e-5), (out, ref)
    print("KERNEL_OK")
</pallas_src>

<mosaic_0001>
module attributes {stable_mosaic.version = 11 : i64} {
  func.func @_ssim_kernel(%arg0: i32, %arg1: memref<3x16x16xf32, #tpu.memory_space<vmem>>, %arg2: memref<3x16x16xf32, #tpu.memory_space<vmem>>, %arg3: memref<16x6xf32, #tpu.memory_space<vmem>>, %arg4: memref<6x16xf32, #tpu.memory_space<vmem>>, %arg5: memref<1x1x128xf32, #tpu.memory_space<vmem>>) attributes {dimension_semantics = [#tpu.dimension_semantics<parallel>], iteration_bounds = array<i64: 2>, scalar_prefetch = 0 : i64, scratch_operands = 0 : i64, tpu.core_type = #tpu.core_type<tc>, window_params = [{transform_indices = @transform_0, window_bounds = array<i64: 3, 16, 16>}, {transform_indices = @transform_1, window_bounds = array<i64: 3, 16, 16>}, {pipeline_mode = #tpu.pipeline_mode<synchronous>, transform_indices = @transform_2, window_bounds = array<i64: 16, 6>}, {pipeline_mode = #tpu.pipeline_mode<synchronous>, transform_indices = @transform_3, window_bounds = array<i64: 6, 16>}, {transform_indices = @transform_4, window_bounds = array<i64: 1, 1, 128>}]} {
    %c0 = arith.constant 0 : index
    %c0_0 = arith.constant 0 : index
    %c0_1 = arith.constant 0 : index
    %0 = vector.load %arg1[%c0, %c0_0, %c0_1] : memref<3x16x16xf32, #tpu.memory_space<vmem>>, vector<3x16x16xf32>
    %c0_2 = arith.constant 0 : index
    %c0_3 = arith.constant 0 : index
    %c0_4 = arith.constant 0 : index
    %1 = vector.load %arg2[%c0_2, %c0_3, %c0_4] : memref<3x16x16xf32, #tpu.memory_space<vmem>>, vector<3x16x16xf32>
    %c0_5 = arith.constant 0 : index
    %c0_6 = arith.constant 0 : index
    %2 = vector.load %arg3[%c0_5, %c0_6] : memref<16x6xf32, #tpu.memory_space<vmem>>, vector<16x6xf32>
    %c0_7 = arith.constant 0 : index
    %c0_8 = arith.constant 0 : index
    %3 = vector.load %arg4[%c0_7, %c0_8] : memref<6x16xf32, #tpu.memory_space<vmem>>, vector<6x16xf32>
    %4 = arith.mulf %0, %0 : vector<3x16x16xf32>
    %5 = arith.mulf %1, %1 : vector<3x16x16xf32>
    %6 = arith.mulf %0, %1 : vector<3x16x16xf32>
    %7 = tpu.concatenate %0, %1, %4, %5, %6 in 0 : vector<3x16x16xf32>, vector<3x16x16xf32>, vector<3x16x16xf32>, vector<3x16x16xf32>, vector<3x16x16xf32> -> vector<15x16x16xf32>
    %8 = vector.shape_cast %7 : vector<15x16x16xf32> to vector<240x16xf32>
    %cst = arith.constant dense<0.000000e+00> : vector<240x6xf32>
    %9 = tpu.matmul %8, %2, %cst {dimension_numbers = #tpu.dot_dimension_numbers<[1], [0], [0], [1], [0, 0, 1, 1], [], []>} : vector<240x16xf32>, vector<16x6xf32>, vector<240x6xf32> -> vector<240x6xf32>
    %10 = vector.shape_cast %9 : vector<240x6xf32> to vector<15x16x6xf32>
    "tpu.trace_start"() <{level = 10 : i32, message = "bhw,ih->bwi"}> : () -> ()
    %cst_9 = arith.constant dense<0.000000e+00> : vector<15x6x6xf32>
    %11 = tpu.matmul %10, %3, %cst_9 {dimension_numbers = #tpu.dot_dimension_numbers<[1], [1], [0, 2], [0], [0, 0, 0, 2, 1, 0], [], []>} : vector<15x16x6xf32>, vector<6x16xf32>, vector<15x6x6xf32> -> vector<15x6x6xf32>
    "tpu.trace_stop"() : () -> ()
    %12 = vector.extract_strided_slice %11 {offsets = [0, 0, 0], sizes = [3, 6, 6], strides = [1, 1, 1]} : vector<15x6x6xf32> to vector<3x6x6xf32>
    %13 = vector.extract_strided_slice %11 {offsets = [3, 0, 0], sizes = [3, 6, 6], strides = [1, 1, 1]} : vector<15x6x6xf32> to vector<3x6x6xf32>
    %14 = vector.extract_strided_slice %11 {offsets = [6, 0, 0], sizes = [3, 6, 6], strides = [1, 1, 1]} : vector<15x6x6xf32> to vector<3x6x6xf32>
    %15 = vector.extract_strided_slice %11 {offsets = [9, 0, 0], sizes = [3, 6, 6], strides = [1, 1, 1]} : vector<15x6x6xf32> to vector<3x6x6xf32>
    %16 = vector.extract_strided_slice %11 {offsets = [12, 0, 0], sizes = [3, 6, 6], strides = [1, 1, 1]} : vector<15x6x6xf32> to vector<3x6x6xf32>
    %17 = arith.mulf %12, %12 : vector<3x6x6xf32>
    %18 = arith.mulf %13, %13 : vector<3x6x6xf32>
    %19 = arith.mulf %12, %13 : vector<3x6x6xf32>
    %20 = arith.subf %14, %17 : vector<3x6x6xf32>
    %21 = arith.subf %15, %18 : vector<3x6x6xf32>
    %22 = arith.subf %16, %19 : vector<3x6x6xf32>
    %cst_10 = arith.constant 2.000000e+00 : f32
    %23 = vector.broadcast %cst_10 : f32 to vector<3x6x6xf32>
    %24 = arith.mulf %23, %22 : vector<3x6x6xf32>
    %cst_11 = arith.constant 5.852250e+01 : f32
    %25 = vector.broadcast %cst_11 : f32 to vector<3x6x6xf32>
    %26 = arith.addf %24, %25 : vector<3x6x6xf32>
    %27 = arith.addf %20, %21 : vector<3x6x6xf32>
    %cst_12 = arith.constant 5.852250e+01 : f32
    %28 = vector.broadcast %cst_12 : f32 to vector<3x6x6xf32>
    %29 = arith.addf %27, %28 : vector<3x6x6xf32>
    %cst_13 = arith.constant 2.000000e+00 : f32
    %30 = vector.broadcast %cst_13 : f32 to vector<3x6x6xf32>
    %31 = arith.mulf %30, %19 : vector<3x6x6xf32>
    %cst_14 = arith.constant 6.502500e+00 : f32
    %32 = vector.broadcast %cst_14 : f32 to vector<3x6x6xf32>
    %33 = arith.addf %31, %32 : vector<3x6x6xf32>
    %34 = arith.addf %17, %18 : vector<3x6x6xf32>
    %cst_15 = arith.constant 6.502500e+00 : f32
    %35 = vector.broadcast %cst_15 : f32 to vector<3x6x6xf32>
    %36 = arith.addf %34, %35 : vector<3x6x6xf32>
    %37 = arith.mulf %33, %26 : vector<3x6x6xf32>
    %38 = tpu.reciprocal %36 : vector<3x6x6xf32> -> vector<3x6x6xf32>
    %39 = tpu.reciprocal %29 : vector<3x6x6xf32> -> vector<3x6x6xf32>
    %40 = arith.mulf %38, %39 : vector<3x6x6xf32>
    %41 = arith.mulf %37, %40 : vector<3x6x6xf32>
    %42 = vector.shape_cast %41 : vector<3x6x6xf32> to vector<1x3x6x6xf32>
    %cst_16 = arith.constant dense<0.000000e+00> : vector<1xf32>
    %43 = vector.multi_reduction <add>, %42, %cst_16 [1, 2, 3] : vector<1x3x6x6xf32> to vector<1xf32>
    %44 = vector.shape_cast %43 : vector<1xf32> to vector<1x1x1x1xf32>
    %45 = vector.extract %44[0, 0, 0, 0] : f32 from vector<1x1x1x1xf32>
    %46 = vector.broadcast %45 : f32 to vector<1x1x128xf32>
    %c0_17 = arith.constant 0 : index
    %c0_18 = arith.constant 0 : index
    %c0_19 = arith.constant 0 : index
    %47 = vector.load %arg5[%c0_17, %c0_18, %c0_19] : memref<1x1x128xf32, #tpu.memory_space<vmem>>, vector<1x1x128xf32>
    tpu.vector_store %arg5[%c0_17, %c0_18, %c0_19], %46 {strides = array<i32>} : memref<1x1x128xf32, #tpu.memory_space<vmem>>, vector<1x1x128xf32>,
    return
  }
  func.func @transform_0(%arg0: i32) -> (i32, i32, i32) {
    %c0_i32 = arith.constant 0 : i32
    %c0_i32_0 = arith.constant 0 : i32
    %c0_i32_1 = arith.constant 0 : i32
    return %arg0, %c0_i32, %c0_i32_0 : i32, i32, i32
  }
  func.func @transform_1(%arg0: i32) -> (i32, i32, i32) {
    %c0_i32 = arith.constant 0 : i32
    %c0_i32_0 = arith.constant 0 : i32
    %c0_i32_1 = arith.constant 0 : i32
    return %arg0, %c0_i32, %c0_i32_0 : i32, i32, i32
  }
  func.func @transform_2(%arg0: i32) -> (i32, i32) {
    %c0_i32 = arith.constant 0 : i32
    %c0_i32_0 = arith.constant 0 : i32
    %c0_i32_1 = arith.constant 0 : i32
    return %c0_i32, %c0_i32_0 : i32, i32
  }
  func.func @transform_3(%arg0: i32) -> (i32, i32) {
    %c0_i32 = arith.constant 0 : i32
    %c0_i32_0 = arith.constant 0 : i32
    %c0_i32_1 = arith.constant 0 : i32
    return %c0_i32, %c0_i32_0 : i32, i32
  }
  func.func @transform_4(%arg0: i32) -> (i32, i32, i32) {
    %c0_i32 = arith.constant 0 : i32
    %c0_i32_0 = arith.constant 0 : i32
    %c0_i32_1 = arith.constant 0 : i32
    return %arg0, %c0_i32, %c0_i32_0 : i32, i32, i32
  }
}

</mosaic_0001>

<llo_original>
// kernel: tpu_custom_call.1
$region0: #{tpu_custom_call.1}
  #allocation0 [shape = 'u32[]', space=smem, size = 0x4, offset = 0x4, fixed_abs, tag = 'smem constant byte address 0x4 - core index']
  #allocation1 [shape = 'u32[72,128]{1,0:T(1,128)}', space=vmem, size = 0x9000, scoped, tag = 'internal scratch']
  %s0 = inlined_call_operand.hbm [shape: f32[6,16,16], index: 0, kind: input, shape index: {}]
  %s1 = inlined_call_operand.hbm [shape: f32[6,16,16], index: 1, kind: input, shape index: {}]
  %s2 = inlined_call_operand.vmem [shape: f32[16,6], index: 2, kind: input, shape index: {}]
  %s3 = inlined_call_operand.vmem [shape: f32[6,16], index: 3, kind: input, shape index: {}]
  %s4 = inlined_call_operand.hbm [shape: f32[2,1,128], index: 4, kind: output, shape index: {}]
  %s5 = sld [smem:[#allocation0]]
  $region57: #{tpu_custom_call.1} parent=0
    _
  %s7 = ssub.s32 1, %s5
  %s8 = scalar_select 0, %s7, %s5
  $region1: #{tpu_custom_call.1} parent=0
    #allocation2 [shape = 'u8[49152]{0}', space=vmem, size = 0xc000, scoped, tag = 'input window, operand 0']
    #allocation3 [shape = 's32[2]{0}', space=sflag, size = 0x8, scoped, tag = 'scoped memory for tpu_custom_call.1']
    #allocation4 [shape = 's32[2]{0}', space=sflag, size = 0x8, scoped, tag = 'scoped memory for tpu_custom_call.1']
    #allocation5 [shape = 'u8[49152]{0}', space=vmem, size = 0xc000, scoped, tag = 'input window, operand 1']
    #allocation6 [shape = 's32[2]{0}', space=sflag, size = 0x8, scoped, tag = 'scoped memory for tpu_custom_call.1']
    #allocation7 [shape = 'u8[1024]{0}', space=vmem, size = 0x400, scoped, tag = 'output window, operand 0']
    %9 = vsyncpa [#allocation3], 0
    %s10 = scalar_lea.sflag [#allocation3], 1
    %11 = vsyncpa %s10, 0
    %12 = vsyncpa [#allocation6], 0
    %s13 = scalar_lea.sflag [#allocation6], 1
    %14 = vsyncpa %s13, 0
    %15 = vsyncpa [#allocation4], 0
    %s16 = scalar_lea.sflag [#allocation4], 1
    %17 = vsyncpa %s16, 0
    loop: start=0, step=1, limit=4
    $region2: #{tpu_custom_call.1} parent=1 // loop_pre_header
      _
    $region3: #{tpu_custom_call.1} parent=1 // loop_header
      %s19 = sphi 0, %s23
      %p20 = scmp.ge.s32.totalorder %s19, 4
      %s29 = sphi 0, %s31
      %s32 = sphi 0, %s29
      %s33 = sphi 0, %s32
      %s49 = sphi 0, %s33
      %s55 = sphi 0, %s57
      %s58 = sphi 0, %s55
      %s59 = sphi 0, %s58
      %s75 = sphi 0, %s59
      %s79 = sphi 0, %s79
      %s81 = sphi 0, %s79
      %s82 = sphi 0, %s81
      %s96 = sphi 0, %s82
      %s100 = sphi 0, %s100
      %s102 = sphi 0, %s100
      %s103 = sphi 0, %s102
      %s117 = sphi 0, %s103
      %s123 = sphi 0, %s125
      %s126 = sphi 0, %s123
      %s127 = sphi 0, %s126
      %s143 = sphi 0, %s127
    $region4: #{tpu_custom_call.1} parent=1 // loop_header_branch
      %22 = sbr.rel (%p20) target = $region8
    $region5: #{tpu_custom_call.1} parent=1 // loop_body
      %s24 = ssub.s32 %s19, 1
      %s25 = ssub.s32 %s19, 2
      %s26 = sadd.s32 %s19, 1
      %s27 = ssub.s32 %s19, %s26
      %p28 = scmp.eq.s32.totalorder %s27, 0
      %s30 = sadd.s32 %s29, 1
      %s31 = scalar_select %p28, %s29, %s30
      %p34 = pneg %p28
      %p35 = scmp.eq.s32.totalorder %s19, 1
      %p36 = por %p34, %p35
      %p37 = scmp.ne.s32.totalorder %s29, %s32
      %p38 = scmp.eq.s32.totalorder %s19, 0
      %p39 = por %p37, %p38
      %p40 = scmp.ne.s32.totalorder %s29, %s32
      %p41 = scmp.eq.s32.totalorder %s24, 1
      %p42 = por %p40, %p41
      %p43 = scmp.ne.s32.totalorder %s32, %s33
      %p44 = scmp.eq.s32.totalorder %s24, 0
      %p45 = por %p43, %p44
      %p46 = scmp.ne.s32.totalorder %s32, %s33
      %p47 = scmp.eq.s32.totalorder %s25, 1
      %p48 = por %p46, %p47
      %p50 = scmp.ne.s32.totalorder %s33, %s49
      %p51 = scmp.eq.s32.totalorder %s25, 0
      %p52 = por %p50, %p51
      %s53 = ssub.s32 %s19, %s26
      %p54 = scmp.eq.s32.totalorder %s53, 0
      %s56 = sadd.s32 %s55, 1
      %s57 = scalar_select %p54, %s55, %s56
      %p60 = pneg %p54
      %p61 = scmp.eq.s32.totalorder %s19, 1
      %p62 = por %p60, %p61
      %p63 = scmp.ne.s32.totalorder %s55, %s58
      %p64 = scmp.eq.s32.totalorder %s19, 0
      %p65 = por %p63, %p64
      %p66 = scmp.ne.s32.totalorder %s55, %s58
      %p67 = scmp.eq.s32.totalorder %s24, 1
      %p68 = por %p66, %p67
      %p69 = scmp.ne.s32.totalorder %s58, %s59
      %p70 = scmp.eq.s32.totalorder %s24, 0
      %p71 = por %p69, %p70
      %p72 = scmp.ne.s32.totalorder %s58, %s59
      %p73 = scmp.eq.s32.totalorder %s25, 1
      %p74 = por %p72, %p73
      %p76 = scmp.ne.s32.totalorder %s59, %s75
      %p77 = scmp.eq.s32.totalorder %s25, 0
      %p78 = por %p76, %p77
      %s80 = sadd.s32 %s79, 1
      %p83 = scmp.eq.s32.totalorder %s19, 1
      %p84 = scmp.ne.s32.totalorder %s79, %s81
      %p85 = scmp.eq.s32.totalorder %s19, 0
      %p86 = por %p84, %p85
      %p87 = scmp.ne.s32.totalorder %s79, %s81
      %p88 = scmp.eq.s32.totalorder %s24, 1
      %p89 = por %p87, %p88
      %p90 = scmp.ne.s32.totalorder %s81, %s82
      %p91 = scmp.eq.s32.totalorder %s24, 0
      %p92 = por %p90, %p91
      %p93 = scmp.ne.s32.totalorder %s81, %s82
      %p94 = scmp.eq.s32.totalorder %s25, 1
      %p95 = por %p93, %p94
      %p97 = scmp.ne.s32.totalorder %s82, %s96
      %p98 = scmp.eq.s32.totalorder %s25, 0
      %p99 = por %p97, %p98
      %s101 = sadd.s32 %s100, 1
      %p104 = scmp.eq.s32.totalorder %s19, 1
      %p105 = scmp.ne.s32.totalorder %s100, %s102
      %p106 = scmp.eq.s32.totalorder %s19, 0
      %p107 = por %p105, %p106
      %p108 = scmp.ne.s32.totalorder %s100, %s102
      %p109 = scmp.eq.s32.totalorder %s24, 1
      %p110 = por %p108, %p109
      %p111 = scmp.ne.s32.totalorder %s102, %s103
      %p112 = scmp.eq.s32.totalorder %s24, 0
      %p113 = por %p111, %p112
      %p114 = scmp.ne.s32.totalorder %s102, %s103
      %p115 = scmp.eq.s32.totalorder %s25, 1
      %p116 = por %p114, %p115
      %p118 = scmp.ne.s32.totalorder %s103, %s117
      %p119 = scmp.eq.s32.totalorder %s25, 0
      %p120 = por %p118, %p119
      %s121 = ssub.s32 %s19, %s26
      %p122 = scmp.eq.s32.totalorder %s121, 0
      %s124 = sadd.s32 %s123, 1
      %s125 = scalar_select %p122, %s123, %s124
      %p128 = pneg %p122
      %p129 = scmp.eq.s32.totalorder %s19, 1
      %p130 = por %p128, %p129
      %p131 = scmp.ne.s32.totalorder %s123, %s126
      %p132 = scmp.eq.s32.totalorder %s19, 0
      %p133 = por %p131, %p132
      %p134 = scmp.ne.s32.totalorder %s123, %s126
      %p135 = scmp.eq.s32.totalorder %s24, 1
      %p136 = por %p134, %p135
      %p137 = scmp.ne.s32.totalorder %s126, %s127
      %p138 = scmp.eq.s32.totalorder %s24, 0
      %p139 = por %p137, %p138
      %p140 = scmp.ne.s32.totalorder %s126, %s127
      %p141 = scmp.eq.s32.totalorder %s25, 1
      %p142 = por %p140, %p141
      %p144 = scmp.ne.s32.totalorder %s127, %s143
      %p145 = scmp.eq.s32.totalorder %s25, 0
      %p146 = por %p144, %p145
      %p147 = scmp.le.s32.totalorder 1, %s19
      %p148 = scmp.lt.s32.totalorder %s19, 3
      %p149 = pnand %p147, %p148
      %p150 = pneg %p149
      // Predicated region
      $region9: #{tpu_custom_call.1} parent=5 // pred_check
        _
      $region10: #{tpu_custom_call.1} parent=5 // pred_check_branch
        %152 = sbr.rel (%p149) target = $region12
      $region11: #{tpu_custom_call.1} parent=5 // pred_region
        %s153 = ssub.s32 %s19, 1
        // Predicated region
        $region13: #{tpu_custom_call.1} parent=11 // pred_check
          %p154 = pneg %p92
        $region14: #{tpu_custom_call.1} parent=11 // pred_check_branch
          %156 = sbr.rel (%p154) target = $region16
        $region15: #{tpu_custom_call.1} parent=11 // pred_region
          _
        $region16: #{tpu_custom_call.1} parent=11 // pred_fallthru
          _
        // Predicated region
        $region17: #{tpu_custom_call.1} parent=11 // pred_check
          %p157 = pneg %p113
        $region18: #{tpu_custom_call.1} parent=11 // pred_check_branch
          %159 = sbr.rel (%p157) target = $region20
        $region19: #{tpu_custom_call.1} parent=11 // pred_region
          _
        $region20: #{tpu_custom_call.1} parent=11 // pred_fallthru
          _
      $region12: #{tpu_custom_call.1} parent=5 // pred_fallthru
        _
      %p160 = scmp.lt.s32.totalorder %s19, 2
      // Predicated region
      $region21: #{tpu_custom_call.1} parent=5 // pred_check
        %p161 = pneg %p160
      $region22: #{tpu_custom_call.1} parent=5 // pred_check_branch
        %163 = sbr.rel (%p161) target = $region24
      $region23: #{tpu_custom_call.1} parent=5 // pred_region
        // Predicated region
        $region25: #{tpu_custom_call.1} parent=23 // pred_check
          %p164 = pneg %p39
        $region26: #{tpu_custom_call.1} parent=23 // pred_check_branch
          %166 = sbr.rel (%p164) target = $region28
        $region27: #{tpu_custom_call.1} parent=23 // pred_region
          %s167 = sand.u32 %s29, 1
          %s168 = scalar_lea.sflag [#allocation3], %s167
          %s169 = sand.u32 %s29, 1
          %s170 = smul.addr %s169, 48
          %s171 = scalar_lea.vmem [#allocation2], %s170
          %s172 = smul.u32 3, %s19
          %174 = vsyncadd %s168, 0
          %s175 = smul.addr %s172, 2
          %s176 = smul.addr %s175, 8
          %s177 = scalar_lea.hbm %s0, %s176
          %s178 = sshll.u32 %s177, 4
          %s179 = int_to_ptr.hbm [resolvable:$true] %s178
          %s180 = sshll.u32 %s171, 4
          %s181 = int_to_ptr.vmem [resolvable:$true] %s180
          %186 = dma.hbm_to_vmem [thread:$0]  %s179, 768, %s181, %s168, 128, 128, 8
        $region28: #{tpu_custom_call.1} parent=23 // pred_fallthru
          _
        // Predicated region
        $region29: #{tpu_custom_call.1} parent=23 // pred_check
          %p187 = pneg %p65
        $region30: #{tpu_custom_call.1} parent=23 // pred_check_branch
          %189 = sbr.rel (%p187) target = $region32
        $region31: #{tpu_custom_call.1} parent=23 // pred_region
          %s190 = sand.u32 %s55, 1
          %s191 = scalar_lea.sflag [#allocation6], %s190
          %s192 = sand.u32 %s55, 1
          %s193 = smul.addr %s192, 48
          %s194 = scalar_lea.vmem [#allocation5], %s193
          %s195 = smul.u32 3, %s19
          %197 = vsyncadd %s191, 0
          %s198 = smul.addr %s195, 2
          %s199 = smul.addr %s198, 8
          %s200 = scalar_lea.hbm %s1, %s199
          %s201 = sshll.u32 %s200, 4
          %s202 = int_to_ptr.hbm [resolvable:$true] %s201
          %s203 = sshll.u32 %s194, 4
          %s204 = int_to_ptr.vmem [resolvable:$true] %s203
          %209 = dma.hbm_to_vmem [thread:$0]  %s202, 768, %s204, %s191, 128, 128, 8
        $region32: #{tpu_custom_call.1} parent=23 // pred_fallthru
          _
      $region24: #{tpu_custom_call.1} parent=5 // pred_fallthru
        _
      %p210 = scmp.le.s32.totalorder 1, %s19
      %p211 = scmp.lt.s32.totalorder %s19, 3
      %p212 = pnand %p210, %p211
      %p213 = pneg %p212
      // Predicated region
      $region33: #{tpu_custom_call.1} parent=5 // pred_check
        _
      $region34: #{tpu_custom_call.1} parent=5 // pred_check_branch
        %215 = sbr.rel (%p212) target = $region36
      $region35: #{tpu_custom_call.1} parent=5 // pred_region
        %s216 = ssub.s32 %s19, 1
        %s217 = sand.u32 %s32, 1
        %s218 = scalar_lea.sflag [#allocation3], %s217
        %s219 = sand.u32 %s32, 1
        %s220 = smul.addr %s219, 48
        %s221 = scalar_lea.vmem [#allocation2], %s220
        // Predicated region
        $region37: #{tpu_custom_call.1} parent=35 // pred_check
          %p222 = pneg %p45
        $region38: #{tpu_custom_call.1} parent=35 // pred_check_branch
          %224 = sbr.rel (%p222) target = $region40
        $region39: #{tpu_custom_call.1} parent=35 // pred_region
          %226 = dma.done %s218, 768
        $region40: #{tpu_custom_call.1} parent=35 // pred_fallthru
          _
        %s227 = sand.u32 %s58, 1
        %s228 = scalar_lea.sflag [#allocation6], %s227
        %s229 = sand.u32 %s58, 1
        %s230 = smul.addr %s229, 48
        %s231 = scalar_lea.vmem [#allocation5], %s230
        // Predicated region
        $region41: #{tpu_custom_call.1} parent=35 // pred_check
          %p232 = pneg %p71
        $region42: #{tpu_custom_call.1} parent=35 // pred_check_branch
          %234 = sbr.rel (%p232) target = $region44
        $region43: #{tpu_custom_call.1} parent=35 // pred_region
          %236 = dma.done %s228, 768
        $region44: #{tpu_custom_call.1} parent=35 // pred_fallthru
          _
        %s237 = sand.u32 %s32, 1
        %s238 = scalar_lea.sflag [#allocation3], %s237
        %s239 = sand.u32 %s32, 1
        %s240 = smul.addr %s239, 48
        %s241 = scalar_lea.vmem [#allocation2], %s240
        %p242 = pneg %p45
        %p243 = pneg %p42
        %s244 = sand.u32 %s58, 1
        %s245 = scalar_lea.sflag [#allocation6], %s244
        %s246 = sand.u32 %s58, 1
        %s247 = smul.addr %s246, 48
        %s248 = scalar_lea.vmem [#allocation5], %s247
        %p249 = pneg %p71
        %p250 = pneg %p68
        %p251 = pneg %p92
        %p252 = pneg %p89
        %p253 = pneg %p113
        %p254 = pneg %p110
        %p255 = pneg %p139
        %p256 = pneg %p136
        %s257 = sand.u32 %s126, 1
        %s258 = scalar_lea.sflag [#allocation4], %s257
        %s259 = sand.u32 %s126, 1
        %s260 = scalar_lea.vmem [#allocation7], %s259
        %s261 = smul.u32 3, %s24
        %s262 = smul.u32 3, %s24
        %v263 = vld [vmem:[%s221] sm:$0xff]
        %v264 = vld [vmem:[%s221 + $0x8] sm:$0xff]
        %v265 = vld [vmem:[%s221 + $0x10] sm:$0xff]
        %v266 = vld [vmem:[%s221 + $0x18] sm:$0xff]
        %v267 = vld [vmem:[%s221 + $0x20] sm:$0xff]
        %v268 = vld [vmem:[%s221 + $0x28] sm:$0xff]
        %v269 = vld [vmem:[%s231] sm:$0xff]
        %v270 = vld [vmem:[%s231 + $0x8] sm:$0xff]
        %v271 = vld [vmem:[%s231 + $0x10] sm:$0xff]
        %v272 = vld [vmem:[%s231 + $0x18] sm:$0xff]
        %v273 = vld [vmem:[%s231 + $0x20] sm:$0xff]
        %v274 = vld [vmem:[%s231 + $0x28] sm:$0xff]
        %v275 = vld [vmem:[%s2] sm:$0xff]
        %v276 = vld [vmem:[%s2 + $0x8] sm:$0xff]
        %v277 = vld [vmem:[%s3] sm:$0x3f]
        %v278 = vmul.f32 %v263, %v263
        %v279 = vmul.f32 %v264, %v264
        %v280 = vmul.f32 %v265, %v265
        %v281 = vmul.f32 %v266, %v266
        %v282 = vmul.f32 %v267, %v267
        %v283 = vmul.f32 %v268, %v268
        %v284 = vmul.f32 %v269, %v269
        %v285 = vmul.f32 %v270, %v270
        %v286 = vmul.f32 %v271, %v271
        %v287 = vmul.f32 %v272, %v272
        %v288 = vmul.f32 %v273, %v273
        %v289 = vmul.f32 %v274, %v274
        %v290 = vmul.f32 %v263, %v269
        %v291 = vmul.f32 %v264, %v270
        %v292 = vmul.f32 %v265, %v271
        %v293 = vmul.f32 %v266, %v272
        %v294 = vmul.f32 %v267, %v273
        %v295 = vmul.f32 %v268, %v274
        %vm296 = vcmask 130048
        %v298 = vsel %vm296, %v263, 0
        %v301 = vsel %vm296, %v264, 0
        %v304 = vsel %vm296, %v265, 0
        %v307 = vsel %vm296, %v266, 0
        %v310 = vsel %vm296, %v267, 0
        %v313 = vsel %vm296, %v268, 0
        %v316 = vsel %vm296, %v269, 0
        %v319 = vsel %vm296, %v270, 0
        %v322 = vsel %vm296, %v271, 0
        %v325 = vsel %vm296, %v272, 0
        %v328 = vsel %vm296, %v273, 0
        %v331 = vsel %vm296, %v274, 0
        %v334 = vsel %vm296, %v278, 0
        %v337 = vsel %vm296, %v279, 0
        %v340 = vsel %vm296, %v280, 0
        %v343 = vsel %vm296, %v281, 0
        %v346 = vsel %vm296, %v282, 0
        %v349 = vsel %vm296, %v283, 0
        %v352 = vsel %vm296, %v284, 0
        %v355 = vsel %vm296, %v285, 0
        %v358 = vsel %vm296, %v286, 0
        %v361 = vsel %vm296, %v287, 0
        %v364 = vsel %vm296, %v288, 0
        %v367 = vsel %vm296, %v289, 0
        %v370 = vsel %vm296, %v290, 0
        %v373 = vsel %vm296, %v291, 0
        %v376 = vsel %vm296, %v292, 0
        %v379 = vsel %vm296, %v293, 0
        %v382 = vsel %vm296, %v294, 0
        %v385 = vsel %vm296, %v295, 0
        %387 = vmatpush.msra.mxu0 0.0
        %388 = vmatpush.msra.mxu0 0.0
        %389 = vmatpush.msra.mxu0 0.0
        %390 = vmatpush.msra.mxu0 0.0
        %391 = vmatpush.msra.mxu0 0.0
        %392 = vmatpush.msra.mxu0 0.0
        %393 = vmatpush.msra.mxu0 0.0
        %394 = vmatpush.msra.mxu0 0.0
        %395 = vmatpush.msra.mxu0 0.0
        %396 = vmatpush.msra.mxu0 0.0
        %397 = vmatpush.msra.mxu0 0.0
        %398 = vmatpush.msra.mxu0 0.0
        %399 = vmatpush.msra.mxu0 0.0
        %400 = vmatpush.msra.mxu0 0.0
        %401 = vmatpush.msra.mxu0 %v276
        %402 = vmatpush.msra.mxu0 %v275
        %403 = vmatmul.f32.gmra.mxu0 %v298
        %v404 = vpop.f32.mrf.mxu0
        %v405 = vadd.f32 0.0, %v404
        %406 = vmatmul.f32.gmra.mxu0 %v301
        %v407 = vpop.f32.mrf.mxu0
        %v408 = vadd.f32 0.0, %v407
        %409 = vmatmul.f32.gmra.mxu0 %v304
        %v410 = vpop.f32.mrf.mxu0
        %v411 = vadd.f32 0.0, %v410
        %412 = vmatmul.f32.gmra.mxu0 %v307
        %v413 = vpop.f32.mrf.mxu0
        %v414 = vadd.f32 0.0, %v413
        %415 = vmatmul.f32.gmra.mxu0 %v310
        %v416 = vpop.f32.mrf.mxu0
        %v417 = vadd.f32 0.0, %v416
        %418 = vmatmul.f32.gmra.mxu0 %v313
        %v419 = vpop.f32.mrf.mxu0
        %v420 = vadd.f32 0.0, %v419
        %421 = vmatmul.f32.gmra.mxu0 %v316
        %v422 = vpop.f32.mrf.mxu0
        %v423 = vadd.f32 0.0, %v422
        %424 = vmatmul.f32.gmra.mxu0 %v319
        %v425 = vpop.f32.mrf.mxu0
        %v426 = vadd.f32 0.0, %v425
        %427 = vmatmul.f32.gmra.mxu0 %v322
        %v428 = vpop.f32.mrf.mxu0
        %v429 = vadd.f32 0.0, %v428
        %430 = vmatmul.f32.gmra.mxu0 %v325
        %v431 = vpop.f32.mrf.mxu0
        %v432 = vadd.f32 0.0, %v431
        %433 = vmatmul.f32.gmra.mxu0 %v328
        %v434 = vpop.f32.mrf.mxu0
        %v435 = vadd.f32 0.0, %v434
        %436 = vmatmul.f32.gmra.mxu0 %v331
        %v437 = vpop.f32.mrf.mxu0
        %v438 = vadd.f32 0.0, %v437
        %439 = vmatmul.f32.gmra.mxu0 %v334
        %v440 = vpop.f32.mrf.mxu0
        %v441 = vadd.f32 0.0, %v440
        %442 = vmatmul.f32.gmra.mxu0 %v337
        %v443 = vpop.f32.mrf.mxu0
        %v444 = vadd.f32 0.0, %v443
        %445 = vmatmul.f32.gmra.mxu0 %v340
        %v446 = vpop.f32.mrf.mxu0
        %v447 = vadd.f32 0.0, %v446
        %448 = vmatmul.f32.gmra.mxu0 %v343
        %v449 = vpop.f32.mrf.mxu0
        %v450 = vadd.f32 0.0, %v449
        %451 = vmatmul.f32.gmra.mxu0 %v346
        %v452 = vpop.f32.mrf.mxu0
        %v453 = vadd.f32 0.0, %v452
        %454 = vmatmul.f32.gmra.mxu0 %v349
        %v455 = vpop.f32.mrf.mxu0
        %v456 = vadd.f32 0.0, %v455
        %457 = vmatmul.f32.gmra.mxu0 %v352
        %v458 = vpop.f32.mrf.mxu0
        %v459 = vadd.f32 0.0, %v458
        %460 = vmatmul.f32.gmra.mxu0 %v355
        %v461 = vpop.f32.mrf.mxu0
        %v462 = vadd.f32 0.0, %v461
        %463 = vmatmul.f32.gmra.mxu0 %v358
        %v464 = vpop.f32.mrf.mxu0
        %v465 = vadd.f32 0.0, %v464
        %466 = vmatmul.f32.gmra.mxu0 %v361
        %v467 = vpop.f32.mrf.mxu0
        %v468 = vadd.f32 0.0, %v467
        %469 = vmatmul.f32.gmra.mxu0 %v364
        %v470 = vpop.f32.mrf.mxu0
        %v471 = vadd.f32 0.0, %v470
        %472 = vmatmul.f32.gmra.mxu0 %v367
        %v473 = vpop.f32.mrf.mxu0
        %v474 = vadd.f32 0.0, %v473
        %475 = vmatmul.f32.gmra.mxu0 %v370
        %v476 = vpop.f32.mrf.mxu0
        %v477 = vadd.f32 0.0, %v476
        %478 = vmatmul.f32.gmra.mxu0 %v373
        %v479 = vpop.f32.mrf.mxu0
        %v480 = vadd.f32 0.0, %v479
        %481 = vmatmul.f32.gmra.mxu0 %v376
        %v482 = vpop.f32.mrf.mxu0
        %v483 = vadd.f32 0.0, %v482
        %484 = vmatmul.f32.gmra.mxu0 %v379
        %v485 = vpop.f32.mrf.mxu0
        %v486 = vadd.f32 0.0, %v485
        %487 = vmatmul.f32.gmra.mxu0 %v382
        %v488 = vpop.f32.mrf.mxu0
        %v489 = vadd.f32 0.0, %v488
        %490 = vmatmul.f32.gmra.mxu0 %v385
        %v491 = vpop.f32.mrf.mxu0
        %v492 = vadd.f32 0.0, %v491
        %493 = vdwg.mxu0
        %494 = vxpose.xlu0.b32.start [1/16] %v405, 128
        %495 = vxpose.xlu0.b32.cont [2/16] %v408, 128
        %496 = vxpose.xlu0.b32.cont [3/16] 0.0, 128
        %497 = vxpose.xlu0.b32.cont [4/16] 0.0, 128
        %498 = vxpose.xlu0.b32.cont [5/16] 0.0, 128
        %499 = vxpose.xlu0.b32.cont [6/16] 0.0, 128
        %500 = vxpose.xlu0.b32.cont [7/16] 0.0, 128
        %501 = vxpose.xlu0.b32.cont [8/16] 0.0, 128
        %502 = vxpose.xlu0.b32.cont [9/16] 0.0, 128
        %503 = vxpose.xlu0.b32.cont [10/16] 0.0, 128
        %504 = vxpose.xlu0.b32.cont [11/16] 0.0, 128
        %505 = vxpose.xlu0.b32.cont [12/16] 0.0, 128
        %506 = vxpose.xlu0.b32.cont [13/16] 0.0, 128
        %507 = vxpose.xlu0.b32.cont [14/16] 0.0, 128
        %508 = vxpose.xlu0.b32.cont [15/16] 0.0, 128
        %509 = vxpose.xlu0.b32.end [16/16] 0.0, 128
        %v510 = vpop.trf.xlu0
        %v511 = vpop.trf.xlu0
        %v512 = vpop.trf.xlu0
        %v513 = vpop.trf.xlu0
        %v514 = vpop.trf.xlu0
        %v515 = vpop.trf.xlu0
        %v516 = vpop.trf.xlu0
        %v517 = vpop.trf.xlu0
        %v518 = vpop.trf.xlu0
        %v519 = vpop.trf.xlu0
        %v520 = vpop.trf.xlu0
        %v521 = vpop.trf.xlu0
        %v522 = vpop.trf.xlu0
        %v523 = vpop.trf.xlu0
        %v524 = vpop.trf.xlu0
        %v525 = vpop.trf.xlu0
        %526 = vxpose.xlu0.b32.start [1/16] %v411, 128
        %527 = vxpose.xlu0.b32.cont [2/16] %v414, 128
        %528 = vxpose.xlu0.b32.cont [3/16] 0.0, 128
        %529 = vxpose.xlu0.b32.cont [4/16] 0.0, 128
        %530 = vxpose.xlu0.b32.cont [5/16] 0.0, 128
        %531 = vxpose.xlu0.b32.cont [6/16] 0.0, 128
        %532 = vxpose.xlu0.b32.cont [7/16] 0.0, 128
        %533 = vxpose.xlu0.b32.cont [8/16] 0.0, 128
        %534 = vxpose.xlu0.b32.cont [9/16] 0.0, 128
        %535 = vxpose.xlu0.b32.cont [10/16] 0.0, 128
        %536 = vxpose.xlu0.b32.cont [11/16] 0.0, 128
        %537 = vxpose.xlu0.b32.cont [12/16] 0.0, 128
        %538 = vxpose.xlu0.b32.cont [13/16] 0.0, 128
        %539 = vxpose.xlu0.b32.cont [14/16] 0.0, 128
        %540 = vxpose.xlu0.b32.cont [15/16] 0.0, 128
        %541 = vxpose.xlu0.b32.end [16/16] 0.0, 128
        %v542 = vpop.trf.xlu0
        %v543 = vpop.trf.xlu0
        %v544 = vpop.trf.xlu0
        %v545 = vpop.trf.xlu0
        %v546 = vpop.trf.xlu0
        %v547 = vpop.trf.xlu0
        %v548 = vpop.trf.xlu0
        %v549 = vpop.trf.xlu0
        %v550 = vpop.trf.xlu0
        %v551 = vpop.trf.xlu0
        %v552 = vpop.trf.xlu0
        %v553 = vpop.trf.xlu0
        %v554 = vpop.trf.xlu0
        %v555 = vpop.trf.xlu0
        %v556 = vpop.trf.xlu0
        %v557 = vpop.trf.xlu0
        %558 = vxpose.xlu0.b32.start [1/16] %v417, 128
        %559 = vxpose.xlu0.b32.cont [2/16] %v420, 128
        %560 = vxpose.xlu0.b32.cont [3/16] 0.0, 128
        %561 = vxpose.xlu0.b32.cont [4/16] 0.0, 128
        %562 = vxpose.xlu0.b32.cont [5/16] 0.0, 128
        %563 = vxpose.xlu0.b32.cont [6/16] 0.0, 128
        %564 = vxpose.xlu0.b32.cont [7/16] 0.0, 128
        %565 = vxpose.xlu0.b32.cont [8/16] 0.0, 128
        %566 = vxpose.xlu0.b32.cont [9/16] 0.0, 128
        %567 = vxpose.xlu0.b32.cont [10/16] 0.0, 128
        %568 = vxpose.xlu0.b32.cont [11/16] 0.0, 128
        %569 = vxpose.xlu0.b32.cont [12/16] 0.0, 128
        %570 = vxpose.xlu0.b32.cont [13/16] 0.0, 128
        %571 = vxpose.xlu0.b32.cont [14/16] 0.0, 128
        %572 = vxpose.xlu0.b32.cont [15/16] 0.0, 128
        %573 = vxpose.xlu0.b32.end [16/16] 0.0, 128
        %v574 = vpop.trf.xlu0
        %v575 = vpop.trf.xlu0
        %v576 = vpop.trf.xlu0
        %v577 = vpop.trf.xlu0
        %v578 = vpop.trf.xlu0
        %v579 = vpop.trf.xlu0
        %v580 = vpop.trf.xlu0
        %v581 = vpop.trf.xlu0
        %v582 = vpop.trf.xlu0
        %v583 = vpop.trf.xlu0
        %v584 = vpop.trf.xlu0
        %v585 = vpop.trf.xlu0
        %v586 = vpop.trf.xlu0
        %v587 = vpop.trf.xlu0
        %v588 = vpop.trf.xlu0
        %v589 = vpop.trf.xlu0
        %590 = vxpose.xlu0.b32.start [1/16] %v423, 128
        %591 = vxpose.xlu0.b32.cont [2/16] %v426, 128
        %592 = vxpose.xlu0.b32.cont [3/16] 0.0, 128
        %593 = vxpose.xlu0.b32.cont [4/16] 0.0, 128
        %594 = vxpose.xlu0.b32.cont [5/16] 0.0, 128
        %595 = vxpose.xlu0.b32.cont [6/16] 0.0, 128
        %596 = vxpose.xlu0.b32.cont [7/16] 0.0, 128
        %597 = vxpose.xlu0.b32.cont [8/16] 0.0, 128
        %598 = vxpose.xlu0.b32.cont [9/16] 0.0, 128
        %599 = vxpose.xlu0.b32.cont [10/16] 0.0, 128
        %600 = vxpose.xlu0.b32.cont [11/16] 0.0, 128
        %601 = vxpose.xlu0.b32.cont [12/16] 0.0, 128
        %602 = vxpose.xlu0.b32.cont [13/16] 0.0, 128
        %603 = vxpose.xlu0.b32.cont [14/16] 0.0, 128
        %604 = vxpose.xlu0.b32.cont [15/16] 0.0, 128
        %605 = vxpose.xlu0.b32.end [16/16] 0.0, 128
        %v606 = vpop.trf.xlu0
        %v607 = vpop.trf.xlu0
        %v608 = vpop.trf.xlu0
        %v609 = vpop.trf.xlu0
        %v610 = vpop.trf.xlu0
        %v611 = vpop.trf.xlu0
        %v612 = vpop.trf.xlu0
        %v613 = vpop.trf.xlu0
        %v614 = vpop.trf.xlu0
        %v615 = vpop.trf.xlu0
        %v616 = vpop.trf.xlu0
        %v617 = vpop.trf.xlu0
        %v618 = vpop.trf.xlu0
        %v619 = vpop.trf.xlu0
        %v620 = vpop.trf.xlu0
        %v621 = vpop.trf.xlu0
        %622 = vxpose.xlu0.b32.start [1/16] %v429, 128
        %623 = vxpose.xlu0.b32.cont [2/16] %v432, 128
        %624 = vxpose.xlu0.b32.cont [3/16] 0.0, 128
        %625 = vxpose.xlu0.b32.cont [4/16] 0.0, 128
        %626 = vxpose.xlu0.b32.cont [5/16] 0.0, 128
        %627 = vxpose.xlu0.b32.cont [6/16] 0.0, 128
        %628 = vxpose.xlu0.b32.cont [7/16] 0.0, 128
        %629 = vxpose.xlu0.b32.cont [8/16] 0.0, 128
        %630 = vxpose.xlu0.b32.cont [9/16] 0.0, 128
        %631 = vxpose.xlu0.b32.cont [10/16] 0.0, 128
        %632 = vxpose.xlu0.b32.cont [11/16] 0.0, 128
        %633 = vxpose.xlu0.b32.cont [12/16] 0.0, 128
        %634 = vxpose.xlu0.b32.cont [13/16] 0.0, 128
        %635 = vxpose.xlu0.b32.cont [14/16] 0.0, 128
        %636 = vxpose.xlu0.b32.cont [15/16] 0.0, 128
        %637 = vxpose.xlu0.b32.end [16/16] 0.0, 128
        %v638 = vpop.trf.xlu0
        %v639 = vpop.trf.xlu0
        %v640 = vpop.trf.xlu0
        %v641 = vpop.trf.xlu0
        %v642 = vpop.trf.xlu0
        %v643 = vpop.trf.xlu0
        %v644 = vpop.trf.xlu0
        %v645 = vpop.trf.xlu0
        %v646 = vpop.trf.xlu0
        %v647 = vpop.trf.xlu0
        %v648 = vpop.trf.xlu0
        %v649 = vpop.trf.xlu0
        %v650 = vpop.trf.xlu0
        %v651 = vpop.trf.xlu0
        %v652 = vpop.trf.xlu0
        %v653 = vpop.trf.xlu0
        %654 = vxpose.xlu0.b32.start [1/16] %v435, 128
        %655 = vxpose.xlu0.b32.cont [2/16] %v438, 128
        %656 = vxpose.xlu0.b32.cont [3/16] 0.0, 128
        %657 = vxpose.xlu0.b32.cont [4/16] 0.0, 128
        %658 = vxpose.xlu0.b32.cont [5/16] 0.0, 128
        %659 = vxpose.xlu0.b32.cont [6/16] 0.0, 128
        %660 = vxpose.xlu0.b32.cont [7/16] 0.0, 128
        %661 = vxpose.xlu0.b32.cont [8/16] 0.0, 128
        %662 = vxpose.xlu0.b32.cont [9/16] 0.0, 128
        %663 = vxpose.xlu0.b32.cont [10/16] 0.0, 128
        %664 = vxpose.xlu0.b32.cont [11/16] 0.0, 128
        %665 = vxpose.xlu0.b32.cont [12/16] 0.0, 128
        %666 = vxpose.xlu0.b32.cont [13/16] 0.0, 128
        %667 = vxpose.xlu0.b32.cont [14/16] 0.0, 128
        %668 = vxpose.xlu0.b32.cont [15/16] 0.0, 128
        %669 = vxpose.xlu0.b32.end [16/16] 0.0, 128
        %v670 = vpop.trf.xlu0
        %v671 = vpop.trf.xlu0
        %v672 = vpop.trf.xlu0
        %v673 = vpop.trf.xlu0
        %v674 = vpop.trf.xlu0
        %v675 = vpop.trf.xlu0
        %v676 = vpop.trf.xlu0
        %v677 = vpop.trf.xlu0
        %v678 = vpop.trf.xlu0
        %v679 = vpop.trf.xlu0
        %v680 = vpop.trf.xlu0
        %v681 = vpop.trf.xlu0
        %v682 = vpop.trf.xlu0
        %v683 = vpop.trf.xlu0
        %v684 = vpop.trf.xlu0
        %v685 = vpop.trf.xlu0
        %686 = vxpose.xlu0.b32.start [1/16] %v441, 128
        %687 = vxpose.xlu0.b32.cont [2/16] %v444, 128
        %688 = vxpose.xlu0.b32.cont [3/16] 0.0, 128
        %689 = vxpose.xlu0.b32.cont [4/16] 0.0, 128
        %690 = vxpose.xlu0.b32.cont [5/16] 0.0, 128
        %691 = vxpose.xlu0.b32.cont [6/16] 0.0, 128
        %692 = vxpose.xlu0.b32.cont [7/16] 0.0, 128
        %693 = vxpose.xlu0.b32.cont [8/16] 0.0, 128
        %694 = vxpose.xlu0.b32.cont [9/16] 0.0, 128
        %695 = vxpose.xlu0.b32.cont [10/16] 0.0, 128
        %696 = vxpose.xlu0.b32.cont [11/16] 0.0, 128
        %697 = vxpose.xlu0.b32.cont [12/16] 0.0, 128
        %698 = vxpose.xlu0.b32.cont [13/16] 0.0, 128
        %699 = vxpose.xlu0.b32.cont [14/16] 0.0, 128
        %700 = vxpose.xlu0.b32.cont [15/16] 0.0, 128
        %701 = vxpose.xlu0.b32.end [16/16] 0.0, 128
        %v702 = vpop.trf.xlu0
        %v703 = vpop.trf.xlu0
        %v704 = vpop.trf.xlu0
        %v705 = vpop.trf.xlu0
        %v706 = vpop.trf.xlu0
        %v707 = vpop.trf.xlu0
        %v708 = vpop.trf.xlu0
        %v709 = vpop.trf.xlu0
        %v710 = vpop.trf.xlu0
        %v711 = vpop.trf.xlu0
        %v712 = vpop.trf.xlu0
        %v713 = vpop.trf.xlu0
        %v714 = vpop.trf.xlu0
        %v715 = vpop.trf.xlu0
        %v716 = vpop.trf.xlu0
        %v717 = vpop.trf.xlu0
        %718 = vxpose.xlu0.b32.start [1/16] %v447, 128
        %719 = vxpose.xlu0.b32.cont [2/16] %v450, 128
        %720 = vxpose.xlu0.b32.cont [3/16] 0.0, 128
        %721 = vxpose.xlu0.b32.cont [4/16] 0.0, 128
        %722 = vxpose.xlu0.b32.cont [5/16] 0.0, 128
        %723 = vxpose.xlu0.b32.cont [6/16] 0.0, 128
        %724 = vxpose.xlu0.b32.cont [7/16] 0.0, 128
        %725 = vxpose.xlu0.b32.cont [8/16] 0.0, 128
        %726 = vxpose.xlu0.b32.cont [9/16] 0.0, 128
        %727 = vxpose.xlu0.b32.cont [10/16] 0.0, 128
        %728 = vxpose.xlu0.b32.cont [11/16] 0.0, 128
        %729 = vxpose.xlu0.b32.cont [12/16] 0.0, 128
        %730 = vxpose.xlu0.b32.cont [13/16] 0.0, 128
        %731 = vxpose.xlu0.b32.cont [14/16] 0.0, 128
        %732 = vxpose.xlu0.b32.cont [15/16] 0.0, 128
        %733 = vxpose.xlu0.b32.end [16/16] 0.0, 128
        %v734 = vpop.trf.xlu0
        %v735 = vpop.trf.xlu0
        %v736 = vpop.trf.xlu0
        %v737 = vpop.trf.xlu0
        %v738 = vpop.trf.xlu0
        %v739 = vpop.trf.xlu0
        %v740 = vpop.trf.xlu0
        %v741 = vpop.trf.xlu0
        %v742 = vpop.trf.xlu0
        %v743 = vpop.trf.xlu0
        %v744 = vpop.trf.xlu0
        %v745 = vpop.trf.xlu0
        %v746 = vpop.trf.xlu0
        %v747 = vpop.trf.xlu0
        %v748 = vpop.trf.xlu0
        %v749 = vpop.trf.xlu0
        %750 = vxpose.xlu0.b32.start [1/16] %v453, 128
        %751 = vxpose.xlu0.b32.cont [2/16] %v456, 128
        %752 = vxpose.xlu0.b32.cont [3/16] 0.0, 128
        %753 = vxpose.xlu0.b32.cont [4/16] 0.0, 128
        %754 = vxpose.xlu0.b32.cont [5/16] 0.0, 128
        %755 = vxpose.xlu0.b32.cont [6/16] 0.0, 128
        %756 = vxpose.xlu0.b32.cont [7/16] 0.0, 128
        %757 = vxpose.xlu0.b32.cont [8/16] 0.0, 128
        %758 = vxpose.xlu0.b32.cont [9/16] 0.0, 128
        %759 = vxpose.xlu0.b32.cont [10/16] 0.0, 128
        %760 = vxpose.xlu0.b32.cont [11/16] 0.0, 128
        %761 = vxpose.xlu0.b32.cont [12/16] 0.0, 128
        %762 = vxpose.xlu0.b32.cont [13/16] 0.0, 128
        %763 = vxpose.xlu0.b32.cont [14/16] 0.0, 128
        %764 = vxpose.xlu0.b32.cont [15/16] 0.0, 128
        %765 = vxpose.xlu0.b32.end [16/16] 0.0, 128
        %v766 = vpop.trf.xlu0
        %v767 = vpop.trf.xlu0
        %v768 = vpop.trf.xlu0
        %v769 = vpop.trf.xlu0
        %v770 = vpop.trf.xlu0
        %v771 = vpop.trf.xlu0
        %v772 = vpop.trf.xlu0
        %v773 = vpop.trf.xlu0
        %v774 = vpop.trf.xlu0
        %v775 = vpop.trf.xlu0
        %v776 = vpop.trf.xlu0
        %v777 = vpop.trf.xlu0
        %v778 = vpop.trf.xlu0
        %v779 = vpop.trf.xlu0
        %v780 = vpop.trf.xlu0
        %v781 = vpop.trf.xlu0
        %782 = vxpose.xlu0.b32.start [1/16] %v459, 128
        %783 = vxpose.xlu0.b32.cont [2/16] %v462, 128
        %784 = vxpose.xlu0.b32.cont [3/16] 0.0, 128
        %785 = vxpose.xlu0.b32.cont [4/16] 0.0, 128
        %786 = vxpose.xlu0.b32.cont [5/16] 0.0, 128
        %787 = vxpose.xlu0.b32.cont [6/16] 0.0, 128
        %788 = vxpose.xlu0.b32.cont [7/16] 0.0, 128
        %789 = vxpose.xlu0.b32.cont [8/16] 0.0, 128
        %790 = vxpose.xlu0.b32.cont [9/16] 0.0, 128
        %791 = vxpose.xlu0.b32.cont [10/16] 0.0, 128
        %792 = vxpose.xlu0.b32.cont [11/16] 0.0, 128
        %793 = vxpose.xlu0.b32.cont [12/16] 0.0, 128
        %794 = vxpose.xlu0.b32.cont [13/16] 0.0, 128
        %795 = vxpose.xlu0.b32.cont [14/16] 0.0, 128
        %796 = vxpose.xlu0.b32.cont [15/16] 0.0, 128
        %797 = vxpose.xlu0.b32.end [16/16] 0.0, 128
        %v798 = vpop.trf.xlu0
        %v799 = vpop.trf.xlu0
        %v800 = vpop.trf.xlu0
        %v801 = vpop.trf.xlu0
        %v802 = vpop.trf.xlu0
        %v803 = vpop.trf.xlu0
        %v804 = vpop.trf.xlu0
        %v805 = vpop.trf.xlu0
        %v806 = vpop.trf.xlu0
        %v807 = vpop.trf.xlu0
        %v808 = vpop.trf.xlu0
        %v809 = vpop.trf.xlu0
        %v810 = vpop.trf.xlu0
        %v811 = vpop.trf.xlu0
        %v812 = vpop.trf.xlu0
        %v813 = vpop.trf.xlu0
        %814 = vxpose.xlu0.b32.start [1/16] %v465, 128
        %815 = vxpose.xlu0.b32.cont [2/16] %v468, 128
        %816 = vxpose.xlu0.b32.cont [3/16] 0.0, 128
        %817 = vxpose.xlu0.b32.cont [4/16] 0.0, 128
        %818 = vxpose.xlu0.b32.cont [5/16] 0.0, 128
        %819 = vxpose.xlu0.b32.cont [6/16] 0.0, 128
        %820 = vxpose.xlu0.b32.cont [7/16] 0.0, 128
        %821 = vxpose.xlu0.b32.cont [8/16] 0.0, 128
        %822 = vxpose.xlu0.b32.cont [9/16] 0.0, 128
        %823 = vxpose.xlu0.b32.cont [10/16] 0.0, 128
        %824 = vxpose.xlu0.b32.cont [11/16] 0.0, 128
        %825 = vxpose.xlu0.b32.cont [12/16] 0.0, 128
        %826 = vxpose.xlu0.b32.cont [13/16] 0.0, 128
        %827 = vxpose.xlu0.b32.cont [14/16] 0.0, 128
        %828 = vxpose.xlu0.b32.cont [15/16] 0.0, 128
        %829 = vxpose.xlu0.b32.end [16/16] 0.0, 128
        %v830 = vpop.trf.xlu0
        %v831 = vpop.trf.xlu0
        %v832 = vpop.trf.xlu0
        %v833 = vpop.trf.xlu0
        %v834 = vpop.trf.xlu0
        %v835 = vpop.trf.xlu0
        %v836 = vpop.trf.xlu0
        %v837 = vpop.trf.xlu0
        %v838 = vpop.trf.xlu0
        %v839 = vpop.trf.xlu0
        %v840 = vpop.trf.xlu0
        %v841 = vpop.trf.xlu0
        %v842 = vpop.trf.xlu0
        %v843 = vpop.trf.xlu0
        %v844 = vpop.trf.xlu0
        %v845 = vpop.trf.xlu0
        %846 = vxpose.xlu0.b32.start [1/16] %v471, 128
        %847 = vxpose.xlu0.b32.cont [2/16] %v474, 128
        %848 = vxpose.xlu0.b32.cont [3/16] 0.0, 128
        %849 = vxpose.xlu0.b32.cont [4/16] 0.0, 128
        %850 = vxpose.xlu0.b32.cont [5/16] 0.0, 128
        %851 = vxpose.xlu0.b32.cont [6/16] 0.0, 128
        %852 = vxpose.xlu0.b32.cont [7/16] 0.0, 128
        %853 = vxpose.xlu0.b32.cont [8/16] 0.0, 128
        %854 = vxpose.xlu0.b32.cont [9/16] 0.0, 128
        %855 = vxpose.xlu0.b32.cont [10/16] 0.0, 128
        %856 = vxpose.xlu0.b32.cont [11/16] 0.0, 128
        %857 = vxpose.xlu0.b32.cont [12/16] 0.0, 128
        %858 = vxpose.xlu0.b32.cont [13/16] 0.0, 128
        %859 = vxpose.xlu0.b32.cont [14/16] 0.0, 128
        %860 = vxpose.xlu0.b32.cont [15/16] 0.0, 128
        %861 = vxpose.xlu0.b32.end [16/16] 0.0, 128
        %v862 = vpop.trf.xlu0
        %v863 = vpop.trf.xlu0
        %v864 = vpop.trf.xlu0
        %v865 = vpop.trf.xlu0
        %v866 = vpop.trf.xlu0
        %v867 = vpop.trf.xlu0
        %v868 = vpop.trf.xlu0
        %v869 = vpop.trf.xlu0
        %v870 = vpop.trf.xlu0
        %v871 = vpop.trf.xlu0
        %v872 = vpop.trf.xlu0
        %v873 = vpop.trf.xlu0
        %v874 = vpop.trf.xlu0
        %v875 = vpop.trf.xlu0
        %v876 = vpop.trf.xlu0
        %v877 = vpop.trf.xlu0
        %878 = vxpose.xlu0.b32.start [1/16] %v477, 128
        %879 = vxpose.xlu0.b32.cont [2/16] %v480, 128
        %880 = vxpose.xlu0.b32.cont [3/16] 0.0, 128
        %881 = vxpose.xlu0.b32.cont [4/16] 0.0, 128
        %882 = vxpose.xlu0.b32.cont [5/16] 0.0, 128
        %883 = vxpose.xlu0.b32.cont [6/16] 0.0, 128
        %884 = vxpose.xlu0.b32.cont [7/16] 0.0, 128
        %885 = vxpose.xlu0.b32.cont [8/16] 0.0, 128
        %886 = vxpose.xlu0.b32.cont [9/16] 0.0, 128
        %887 = vxpose.xlu0.b32.cont [10/16] 0.0, 128
        %888 = vxpose.xlu0.b32.cont [11/16] 0.0, 128
        %889 = vxpose.xlu0.b32.cont [12/16] 0.0, 128
        %890 = vxpose.xlu0.b32.cont [13/16] 0.0, 128
        %891 = vxpose.xlu0.b32.cont [14/16] 0.0, 128
        %892 = vxpose.xlu0.b32.cont [15/16] 0.0, 128
        %893 = vxpose.xlu0.b32.end [16/16] 0.0, 128
        %v894 = vpop.trf.xlu0
        %v895 = vpop.trf.xlu0
        %v896 = vpop.trf.xlu0
        %v897 = vpop.trf.xlu0
        %v898 = vpop.trf.xlu0
        %v899 = vpop.trf.xlu0
        %v900 = vpop.trf.xlu0
        %v901 = vpop.trf.xlu0
        %v902 = vpop.trf.xlu0
        %v903 = vpop.trf.xlu0
        %v904 = vpop.trf.xlu0
        %v905 = vpop.trf.xlu0
        %v906 = vpop.trf.xlu0
        %v907 = vpop.trf.xlu0
        %v908 = vpop.trf.xlu0
        %v909 = vpop.trf.xlu0
        %910 = vxpose.xlu0.b32.start [1/16] %v483, 128
        %911 = vxpose.xlu0.b32.cont [2/16] %v486, 128
        %912 = vxpose.xlu0.b32.cont [3/16] 0.0, 128
        %913 = vxpose.xlu0.b32.cont [4/16] 0.0, 128
        %914 = vxpose.xlu0.b32.cont [5/16] 0.0, 128
        %915 = vxpose.xlu0.b32.cont [6/16] 0.0, 128
        %916 = vxpose.xlu0.b32.cont [7/16] 0.0, 128
        %917 = vxpose.xlu0.b32.cont [8/16] 0.0, 128
        %918 = vxpose.xlu0.b32.cont [9/16] 0.0, 128
        %919 = vxpose.xlu0.b32.cont [10/16] 0.0, 128
        %920 = vxpose.xlu0.b32.cont [11/16] 0.0, 128
        %921 = vxpose.xlu0.b32.cont [12/16] 0.0, 128
        %922 = vxpose.xlu0.b32.cont [13/16] 0.0, 128
        %923 = vxpose.xlu0.b32.cont [14/16] 0.0, 128
        %924 = vxpose.xlu0.b32.cont [15/16] 0.0, 128
        %925 = vxpose.xlu0.b32.end [16/16] 0.0, 128
        %v926 = vpop.trf.xlu0
        %v927 = vpop.trf.xlu0
        %v928 = vpop.trf.xlu0
        %v929 = vpop.trf.xlu0
        %v930 = vpop.trf.xlu0
        %v931 = vpop.trf.xlu0
        %v932 = vpop.trf.xlu0
        %v933 = vpop.trf.xlu0
        %v934 = vpop.trf.xlu0
        %v935 = vpop.trf.xlu0
        %v936 = vpop.trf.xlu0
        %v937 = vpop.trf.xlu0
        %v938 = vpop.trf.xlu0
        %v939 = vpop.trf.xlu0
        %v940 = vpop.trf.xlu0
        %v941 = vpop.trf.xlu0
        %942 = vxpose.xlu0.b32.start [1/16] %v489, 128
        %943 = vxpose.xlu0.b32.cont [2/16] %v492, 128
        %944 = vxpose.xlu0.b32.cont [3/16] 0.0, 128
        %945 = vxpose.xlu0.b32.cont [4/16] 0.0, 128
        %946 = vxpose.xlu0.b32.cont [5/16] 0.0, 128
        %947 = vxpose.xlu0.b32.cont [6/16] 0.0, 128
        %948 = vxpose.xlu0.b32.cont [7/16] 0.0, 128
        %949 = vxpose.xlu0.b32.cont [8/16] 0.0, 128
        %950 = vxpose.xlu0.b32.cont [9/16] 0.0, 128
        %951 = vxpose.xlu0.b32.cont [10/16] 0.0, 128
        %952 = vxpose.xlu0.b32.cont [11/16] 0.0, 128
        %953 = vxpose.xlu0.b32.cont [12/16] 0.0, 128
        %954 = vxpose.xlu0.b32.cont [13/16] 0.0, 128
        %955 = vxpose.xlu0.b32.cont [14/16] 0.0, 128
        %956 = vxpose.xlu0.b32.cont [15/16] 0.0, 128
        %957 = vxpose.xlu0.b32.end [16/16] 0.0, 128
        %v958 = vpop.trf.xlu0
        %v959 = vpop.trf.xlu0
        %v960 = vpop.trf.xlu0
        %v961 = vpop.trf.xlu0
        %v962 = vpop.trf.xlu0
        %v963 = vpop.trf.xlu0
        %v964 = vpop.trf.xlu0
        %v965 = vpop.trf.xlu0
        %v966 = vpop.trf.xlu0
        %v967 = vpop.trf.xlu0
        %v968 = vpop.trf.xlu0
        %v969 = vpop.trf.xlu0
        %v970 = vpop.trf.xlu0
        %v971 = vpop.trf.xlu0
        %v972 = vpop.trf.xlu0
        %v973 = vpop.trf.xlu0
        %v989 = vrot.slane %v510, 2
        %v990 = vrot.slane %v510, 4
        %v991 = vrot.slane %v542, 2
        %v992 = vrot.slane %v542, 4
        %v993 = vrot.slane %v574, 2
        %v994 = vrot.slane %v574, 4
        %v995 = vrot.slane %v606, 2
        %v996 = vrot.slane %v606, 4
        %v997 = vrot.slane %v638, 2
        %v998 = vrot.slane %v638, 4
        %v999 = vrot.slane %v670, 2
        %v1000 = vrot.slane %v670, 4
        %v1001 = vrot.slane %v702, 2
        %v1002 = vrot.slane %v702, 4
        %v1003 = vrot.slane %v734, 2
        %v1004 = vrot.slane %v734, 4
        %v1005 = vrot.slane %v766, 2
        %v1006 = vrot.slane %v766, 4
        %v1007 = vrot.slane %v798, 2
        %v1008 = vrot.slane %v798, 4
        %v1009 = vrot.slane %v830, 2
        %v1010 = vrot.slane %v830, 4
        %v1011 = vrot.slane %v862, 2
        %v1012 = vrot.slane %v862, 4
        %v1013 = vrot.slane %v894, 2
        %v1014 = vrot.slane %v894, 4
        %v1015 = vrot.slane %v926, 2
        %v1016 = vrot.slane %v926, 4
        %v1017 = vrot.slane %v958, 2
        %v1018 = vrot.slane %v958, 4
        %1019 = vst [vmem:[#allocation1] ss:$4 sm:$0xff] %v510
        %s1020 = scalar_lea.vmem [#allocation1], 1
        %1021 = vst [vmem:[%s1020] ss:$4 sm:$0xff] %v989
        %s1022 = scalar_lea.vmem [#allocation1], 2
        %1023 = vst [vmem:[%s1022] ss:$4 sm:$0xff] %v990
        %s1024 = scalar_lea.vmem [#allocation1], 3
        %1025 = vst [vmem:[%s1024] ss:$4 sm:$0xff] %v542
        %s1026 = scalar_lea.vmem [#allocation1], 32
        %1027 = vst [vmem:[%s1026] ss:$4 sm:$0xff] %v991
        %s1028 = scalar_lea.vmem [#allocation1], 33
        %1029 = vst [vmem:[%s1028] ss:$4 sm:$0xff] %v992
        %s1030 = scalar_lea.vmem [#allocation1], 34
        %1031 = vst [vmem:[%s1030] ss:$4 sm:$0xff] %v574
        %s1032 = scalar_lea.vmem [#allocation1], 35
        %1033 = vst [vmem:[%s1032] ss:$4 sm:$0xff] %v993
        %v1034 = vld.sshfl [vmem:[#allocation1] sm:$0xff pattern:$0x73625140]
        %v1035 = vld.sshfl [vmem:[#allocation1 + $0x20] sm:$0xff pattern:$0x73625140]
        %1036 = vst [vmem:[#allocation1] ss:$4 sm:$0xff] %v994
        %1037 = vst [vmem:[%s1020] ss:$4 sm:$0xff] %v606
        %1038 = vst [vmem:[%s1022] ss:$4 sm:$0xff] %v995
        %1039 = vst [vmem:[%s1024] ss:$4 sm:$0xff] %v996
        %1040 = vst [vmem:[%s1026] ss:$4 sm:$0xff] %v638
        %1041 = vst [vmem:[%s1028] ss:$4 sm:$0xff] %v997
        %1042 = vst [vmem:[%s1030] ss:$4 sm:$0xff] %v998
        %1043 = vst [vmem:[%s1032] ss:$4 sm:$0xff] %v670
        %v1044 = vld.sshfl [vmem:[#allocation1] sm:$0xff pattern:$0x73625140]
        %v1045 = vld.sshfl [vmem:[#allocation1 + $0x20] sm:$0xff pattern:$0x73625140]
        %1046 = vst [vmem:[#allocation1] ss:$4 sm:$0xff] %v999
        %1047 = vst [vmem:[%s1020] ss:$4 sm:$0xff] %v1000
        %1048 = vst [vmem:[%s1022] ss:$4 sm:$0xff] %v702
        %1049 = vst [vmem:[%s1024] ss:$4 sm:$0xff] %v1001
        %1050 = vst [vmem:[%s1026] ss:$4 sm:$0xff] %v1002
        %1051 = vst [vmem:[%s1028] ss:$4 sm:$0xff] %v734
        %1052 = vst [vmem:[%s1030] ss:$4 sm:$0xff] %v1003
        %1053 = vst [vmem:[%s1032] ss:$4 sm:$0xff] %v1004
        %v1054 = vld.sshfl [vmem:[#allocation1] sm:$0xff pattern:$0x73625140]
        %v1055 = vld.sshfl [vmem:[#allocation1 + $0x20] sm:$0xff pattern:$0x73625140]
        %1056 = vst [vmem:[#allocation1] ss:$4 sm:$0xff] %v766
        %1057 = vst [vmem:[%s1020] ss:$4 sm:$0xff] %v1005
        %1058 = vst [vmem:[%s1022] ss:$4 sm:$0xff] %v1006
        %1059 = vst [vmem:[%s1024] ss:$4 sm:$0xff] %v798
        %1060 = vst [vmem:[%s1026] ss:$4 sm:$0xff] %v1007
        %1061 = vst [vmem:[%s1028] ss:$4 sm:$0xff] %v1008
        %1062 = vst [vmem:[%s1030] ss:$4 sm:$0xff] %v830
        %1063 = vst [vmem:[%s1032] ss:$4 sm:$0xff] %v1009
        %v1064 = vld.sshfl [vmem:[#allocation1] sm:$0xff pattern:$0x73625140]
        %v1065 = vld.sshfl [vmem:[#allocation1 + $0x20] sm:$0xff pattern:$0x73625140]
        %1066 = vst [vmem:[#allocation1] ss:$4 sm:$0xff] %v1010
        %1067 = vst [vmem:[%s1020] ss:$4 sm:$0xff] %v862
        %1068 = vst [vmem:[%s1022] ss:$4 sm:$0xff] %v1011
        %1069 = vst [vmem:[%s1024] ss:$4 sm:$0xff] %v1012
        %1070 = vst [vmem:[%s1026] ss:$4 sm:$0xff] %v894
        %1071 = vst [vmem:[%s1028] ss:$4 sm:$0xff] %v1013
        %1072 = vst [vmem:[%s1030] ss:$4 sm:$0xff] %v1014
        %1073 = vst [vmem:[%s1032] ss:$4 sm:$0xff] %v926
        %v1074 = vld.sshfl [vmem:[#allocation1] sm:$0xff pattern:$0x73625140]
        %v1075 = vld.sshfl [vmem:[#allocation1 + $0x20] sm:$0xff pattern:$0x73625140]
        %1076 = vst [vmem:[#allocation1] ss:$4 sm:$0xff] %v1015
        %1077 = vst [vmem:[%s1020] ss:$4 sm:$0xff] %v1016
        %1078 = vst [vmem:[%s1022] ss:$4 sm:$0xff] %v958
        %1079 = vst [vmem:[%s1024] ss:$4 sm:$0xff] %v1017
        %1080 = vst [vmem:[%s1026] ss:$4 sm:$0xff] %v1018
        %v1081 = vld.sshfl [vmem:[#allocation1] sm:$0xff pattern:$0x73625140]
        %v1082 = vld.sshfl [vmem:[#allocation1 + $0x20] sm:$0xff pattern:$0x73625140]
        %v1083 = vsel %vm296, %v1034, 0
        %v1085 = vsel %vm296, %v1035, 0
        %v1087 = vsel %vm296, %v1044, 0
        %v1089 = vsel %vm296, %v1045, 0
        %v1091 = vsel %vm296, %v1054, 0
        %v1093 = vsel %vm296, %v1055, 0
        %v1095 = vsel %vm296, %v1064, 0
        %v1097 = vsel %vm296, %v1065, 0
        %v1099 = vsel %vm296, %v1074, 0
        %v1101 = vsel %vm296, %v1075, 0
        %v1103 = vsel %vm296, %v1081, 0
        %v1105 = vsel %vm296, %v1082, 0
        %v1108 = vsel %vm296, %v277, 0
        %1110 = vmatpush.xpose.msra.mxu0 0.0
        %1111 = vmatpush.xpose.msra.mxu0 0.0
        %1112 = vmatpush.xpose.msra.mxu0 0.0
        %1113 = vmatpush.xpose.msra.mxu0 0.0
        %1114 = vmatpush.xpose.msra.mxu0 0.0
        %1115 = vmatpush.xpose.msra.mxu0 0.0
        %1116 = vmatpush.xpose.msra.mxu0 0.0
        %1117 = vmatpush.xpose.msra.mxu0 0.0
        %1118 = vmatpush.xpose.msra.mxu0 0.0
        %1119 = vmatpush.xpose.msra.mxu0 0.0
        %1120 = vmatpush.xpose.msra.mxu0 0.0
        %1121 = vmatpush.xpose.msra.mxu0 0.0
        %1122 = vmatpush.xpose.msra.mxu0 0.0
        %1123 = vmatpush.xpose.msra.mxu0 0.0
        %1124 = vmatpush.xpose.msra.mxu0 0.0
        %1125 = vmatpush.xpose.msra.mxu0 %v1108
        %1126 = vmatmul.f32.gmra.mxu0 %v1083
        %v1127 = vpop.f32.mrf.mxu0
        %v1128 = vadd.f32 0.0, %v1127
        %1129 = vmatmul.f32.gmra.mxu0 %v1085
        %v1130 = vpop.f32.mrf.mxu0
        %v1131 = vadd.f32 0.0, %v1130
        %1132 = vmatmul.f32.gmra.mxu0 %v1087
        %v1133 = vpop.f32.mrf.mxu0
        %v1134 = vadd.f32 0.0, %v1133
        %1135 = vmatmul.f32.gmra.mxu0 %v1089
        %v1136 = vpop.f32.mrf.mxu0
        %v1137 = vadd.f32 0.0, %v1136
        %1138 = vmatmul.f32.gmra.mxu0 %v1091
        %v1139 = vpop.f32.mrf.mxu0
        %v1140 = vadd.f32 0.0, %v1139
        %1141 = vmatmul.f32.gmra.mxu0 %v1093
        %v1142 = vpop.f32.mrf.mxu0
        %v1143 = vadd.f32 0.0, %v1142
        %1144 = vmatmul.f32.gmra.mxu0 %v1095
        %v1145 = vpop.f32.mrf.mxu0
        %v1146 = vadd.f32 0.0, %v1145
        %1147 = vmatmul.f32.gmra.mxu0 %v1097
        %v1148 = vpop.f32.mrf.mxu0
        %v1149 = vadd.f32 0.0, %v1148
        %1150 = vmatmul.f32.gmra.mxu0 %v1099
        %v1151 = vpop.f32.mrf.mxu0
        %v1152 = vadd.f32 0.0, %v1151
        %1153 = vmatmul.f32.gmra.mxu0 %v1101
        %v1154 = vpop.f32.mrf.mxu0
        %v1155 = vadd.f32 0.0, %v1154
        %1156 = vmatmul.f32.gmra.mxu0 %v1103
        %v1157 = vpop.f32.mrf.mxu0
        %v1158 = vadd.f32 0.0, %v1157
        %1159 = vmatmul.f32.gmra.mxu0 %v1105
        %v1160 = vpop.f32.mrf.mxu0
        %v1161 = vadd.f32 0.0, %v1160
        %1162 = vdwg.mxu0
        %v1174 = vrot.slane %v1128, 2
        %v1175 = vrot.slane %v1128, 4
        %v1176 = vrot.slane %v1128, 6
        %v1177 = vrot.slane %v1131, 2
        %v1178 = vrot.slane %v1131, 4
        %v1179 = vrot.slane %v1131, 6
        %v1180 = vrot.slane %v1134, 2
        %v1181 = vrot.slane %v1134, 4
        %v1182 = vrot.slane %v1134, 6
        %v1183 = vrot.slane %v1137, 2
        %v1184 = vrot.slane %v1137, 4
        %v1185 = vrot.slane %v1137, 6
        %v1186 = vrot.slane %v1140, 2
        %v1187 = vrot.slane %v1140, 4
        %v1188 = vrot.slane %v1140, 6
        %v1189 = vrot.slane %v1143, 2
        %v1190 = vrot.slane %v1143, 4
        %v1191 = vrot.slane %v1143, 6
        %v1192 = vrot.slane %v1146, 2
        %v1193 = vrot.slane %v1146, 4
        %v1194 = vrot.slane %v1146, 6
        %v1195 = vrot.slane %v1149, 2
        %v1196 = vrot.slane %v1149, 4
        %v1197 = vrot.slane %v1149, 6
        %v1198 = vrot.slane %v1152, 2
        %v1199 = vrot.slane %v1152, 4
        %v1200 = vrot.slane %v1152, 6
        %v1201 = vrot.slane %v1155, 2
        %v1202 = vrot.slane %v1155, 4
        %v1203 = vrot.slane %v1155, 6
        %v1204 = vrot.slane %v1158, 2
        %v1205 = vrot.slane %v1158, 4
        %v1206 = vrot.slane %v1158, 6
        %v1240 = vmul.f32 %v1128, %v1128
        %v1241 = vmul.f32 %v1174, %v1174
        %v1242 = vmul.f32 %v1175, %v1175
        %v1243 = vmul.f32 %v1176, %v1176
        %v1244 = vmul.f32 %v1131, %v1131
        %v1245 = vmul.f32 %v1177, %v1177
        %v1246 = vmul.f32 %v1178, %v1178
        %v1247 = vmul.f32 %v1179, %v1179
        %v1248 = vmul.f32 %v1134, %v1134
        %v1249 = vmul.f32 %v1180, %v1180
        %v1250 = vmul.f32 %v1181, %v1181
        %v1251 = vmul.f32 %v1182, %v1182
        %v1252 = vmul.f32 %v1137, %v1137
        %v1253 = vmul.f32 %v1183, %v1183
        %v1254 = vmul.f32 %v1184, %v1184
        %v1255 = vmul.f32 %v1185, %v1185
        %v1256 = vmul.f32 %v1140, %v1140
        %v1257 = vmul.f32 %v1186, %v1186
        %v1258 = vmul.f32 %v1128, %v1180
        %v1259 = vmul.f32 %v1174, %v1181
        %v1260 = vmul.f32 %v1175, %v1182
        %v1261 = vmul.f32 %v1176, %v1137
        %v1262 = vmul.f32 %v1131, %v1183
        %v1263 = vmul.f32 %v1177, %v1184
        %v1264 = vmul.f32 %v1178, %v1185
        %v1265 = vmul.f32 %v1179, %v1140
        %v1266 = vmul.f32 %v1134, %v1186
        %v1267 = vsub.f32 %v1187, %v1240
        %v1268 = vsub.f32 %v1188, %v1241
        %v1269 = vsub.f32 %v1143, %v1242
        %v1270 = vsub.f32 %v1189, %v1243
        %v1271 = vsub.f32 %v1190, %v1244
        %v1272 = vsub.f32 %v1191, %v1245
        %v1273 = vsub.f32 %v1146, %v1246
        %v1274 = vsub.f32 %v1192, %v1247
        %v1275 = vsub.f32 %v1193, %v1248
        %v1276 = vsub.f32 %v1194, %v1249
        %v1277 = vsub.f32 %v1149, %v1250
        %v1278 = vsub.f32 %v1195, %v1251
        %v1279 = vsub.f32 %v1196, %v1252
        %v1280 = vsub.f32 %v1197, %v1253
        %v1281 = vsub.f32 %v1152, %v1254
        %v1282 = vsub.f32 %v1198, %v1255
        %v1283 = vsub.f32 %v1199, %v1256
        %v1284 = vsub.f32 %v1200, %v1257
        %v1285 = vsub.f32 %v1155, %v1258
        %v1286 = vsub.f32 %v1201, %v1259
        %v1287 = vsub.f32 %v1202, %v1260
        %v1288 = vsub.f32 %v1203, %v1261
        %v1289 = vsub.f32 %v1158, %v1262
        %v1290 = vsub.f32 %v1204, %v1263
        %v1291 = vsub.f32 %v1205, %v1264
        %v1292 = vsub.f32 %v1206, %v1265
        %v1293 = vsub.f32 %v1161, %v1266
        %v1294 = vmul.f32 %v1285, 2.0
        %v1295 = vmul.f32 %v1286, 2.0
        %v1296 = vmul.f32 %v1287, 2.0
        %v1297 = vmul.f32 %v1288, 2.0
        %v1298 = vmul.f32 %v1289, 2.0
        %v1299 = vmul.f32 %v1290, 2.0
        %v1300 = vmul.f32 %v1291, 2.0
        %v1301 = vmul.f32 %v1292, 2.0
        %v1302 = vmul.f32 %v1293, 2.0
        %v1303 = vadd.f32 %v1294, 58.5225
        %v1304 = vadd.f32 %v1295, 58.5225
        %v1305 = vadd.f32 %v1296, 58.5225
        %v1306 = vadd.f32 %v1297, 58.5225
        %v1307 = vadd.f32 %v1298, 58.5225
        %v1308 = vadd.f32 %v1299, 58.5225
        %v1309 = vadd.f32 %v1300, 58.5225
        %v1310 = vadd.f32 %v1301, 58.5225
        %v1311 = vadd.f32 %v1302, 58.5225
        %v1312 = vadd.f32 %v1267, %v1276
        %v1313 = vadd.f32 %v1268, %v1277
        %v1314 = vadd.f32 %v1269, %v1278
        %v1315 = vadd.f32 %v1270, %v1279
        %v1316 = vadd.f32 %v1271, %v1280
        %v1317 = vadd.f32 %v1272, %v1281
        %v1318 = vadd.f32 %v1273, %v1282
        %v1319 = vadd.f32 %v1274, %v1283
        %v1320 = vadd.f32 %v1275, %v1284
        %v1321 = vadd.f32 %v1312, 58.5225
        %v1322 = vadd.f32 %v1313, 58.5225
        %v1323 = vadd.f32 %v1314, 58.5225
        %v1324 = vadd.f32 %v1315, 58.5225
        %v1325 = vadd.f32 %v1316, 58.5225
        %v1326 = vadd.f32 %v1317, 58.5225
        %v1327 = vadd.f32 %v1318, 58.5225
        %v1328 = vadd.f32 %v1319, 58.5225
        %v1329 = vadd.f32 %v1320, 58.5225
        %v1330 = vmul.f32 %v1258, 2.0
        %v1331 = vmul.f32 %v1259, 2.0
        %v1332 = vmul.f32 %v1260, 2.0
        %v1333 = vmul.f32 %v1261, 2.0
        %v1334 = vmul.f32 %v1262, 2.0
        %v1335 = vmul.f32 %v1263, 2.0
        %v1336 = vmul.f32 %v1264, 2.0
        %v1337 = vmul.f32 %v1265, 2.0
        %v1338 = vmul.f32 %v1266, 2.0
        %v1339 = vadd.f32 %v1330, 6.5025
        %v1340 = vadd.f32 %v1331, 6.5025
        %v1341 = vadd.f32 %v1332, 6.5025
        %v1342 = vadd.f32 %v1333, 6.5025
        %v1343 = vadd.f32 %v1334, 6.5025
        %v1344 = vadd.f32 %v1335, 6.5025
        %v1345 = vadd.f32 %v1336, 6.5025
        %v1346 = vadd.f32 %v1337, 6.5025
        %v1347 = vadd.f32 %v1338, 6.5025
        %v1348 = vadd.f32 %v1240, %v1249
        %v1349 = vadd.f32 %v1241, %v1250
        %v1350 = vadd.f32 %v1242, %v1251
        %v1351 = vadd.f32 %v1243, %v1252
        %v1352 = vadd.f32 %v1244, %v1253
        %v1353 = vadd.f32 %v1245, %v1254
        %v1354 = vadd.f32 %v1246, %v1255
        %v1355 = vadd.f32 %v1247, %v1256
        %v1356 = vadd.f32 %v1248, %v1257
        %v1357 = vadd.f32 %v1348, 6.5025
        %v1358 = vadd.f32 %v1349, 6.5025
        %v1359 = vadd.f32 %v1350, 6.5025
        %v1360 = vadd.f32 %v1351, 6.5025
        %v1361 = vadd.f32 %v1352, 6.5025
        %v1362 = vadd.f32 %v1353, 6.5025
        %v1363 = vadd.f32 %v1354, 6.5025
        %v1364 = vadd.f32 %v1355, 6.5025
        %v1365 = vadd.f32 %v1356, 6.5025
        %v1366 = vmul.f32 %v1339, %v1303
        %v1367 = vmul.f32 %v1340, %v1304
        %v1368 = vmul.f32 %v1341, %v1305
        %v1369 = vmul.f32 %v1342, %v1306
        %v1370 = vmul.f32 %v1343, %v1307
        %v1371 = vmul.f32 %v1344, %v1308
        %v1372 = vmul.f32 %v1345, %v1309
        %v1373 = vmul.f32 %v1346, %v1310
        %v1374 = vmul.f32 %v1347, %v1311
        %v1375 = vrcp.pop %v1357
        %v1376 = vmul.f32 %v1357, %v1375
        %v1377 = vsub.f32 1.0, %v1376
        %v1378 = vmul.f32 %v1375, %v1377
        %v1379 = vadd.f32 %v1375, %v1378
        %vm1380 = vweird.f32 %v1357
        %vm1381 = vweird.f32 %v1375
        %vm1382 = vmor %vm1380, %vm1381
        %v1383 = vsel %vm1382, %v1375, %v1379
        %v1384 = vand.u32 2147483647, %v1357
        %vm1385 = vcmp.eq.f32.partialorder %v1384, 8.507059e+37
        %v1386 = vand.u32 %v1357, 2147483648
        %v1387 = vor.u32 1.1754944e-38, %v1386
        %v1388 = vsel %vm1385, %v1387, %v1383
        %v1389 = vrcp.pop %v1358
        %v1390 = vmul.f32 %v1358, %v1389
        %v1391 = vsub.f32 1.0, %v1390
        %v1392 = vmul.f32 %v1389, %v1391
        %v1393 = vadd.f32 %v1389, %v1392
        %vm1394 = vweird.f32 %v1358
        %vm1395 = vweird.f32 %v1389
        %vm1396 = vmor %vm1394, %vm1395
        %v1397 = vsel %vm1396, %v1389, %v1393
        %v1398 = vand.u32 2147483647, %v1358
        %vm1399 = vcmp.eq.f32.partialorder %v1398, 8.507059e+37
        %v1400 = vand.u32 %v1358, 2147483648
        %v1401 = vor.u32 1.1754944e-38, %v1400
        %v1402 = vsel %vm1399, %v1401, %v1397
        %v1403 = vrcp.pop %v1359
        %v1404 = vmul.f32 %v1359, %v1403
        %v1405 = vsub.f32 1.0, %v1404
        %v1406 = vmul.f32 %v1403, %v1405
        %v1407 = vadd.f32 %v1403, %v1406
        %vm1408 = vweird.f32 %v1359
        %vm1409 = vweird.f32 %v1403
        %vm1410 = vmor %vm1408, %vm1409
        %v1411 = vsel %vm1410, %v1403, %v1407
        %v1412 = vand.u32 2147483647, %v1359
        %vm1413 = vcmp.eq.f32.partialorder %v1412, 8.507059e+37
        %v1414 = vand.u32 %v1359, 2147483648
        %v1415 = vor.u32 1.1754944e-38, %v1414
        %v1416 = vsel %vm1413, %v1415, %v1411
        %v1417 = vrcp.pop %v1360
        %v1418 = vmul.f32 %v1360, %v1417
        %v1419 = vsub.f32 1.0, %v1418
        %v1420 = vmul.f32 %v1417, %v1419
        %v1421 = vadd.f32 %v1417, %v1420
        %vm1422 = vweird.f32 %v1360
        %vm1423 = vweird.f32 %v1417
        %vm1424 = vmor %vm1422, %vm1423
        %v1425 = vsel %vm1424, %v1417, %v1421
        %v1426 = vand.u32 2147483647, %v1360
        %vm1427 = vcmp.eq.f32.partialorder %v1426, 8.507059e+37
        %v1428 = vand.u32 %v1360, 2147483648
        %v1429 = vor.u32 1.1754944e-38, %v1428
        %v1430 = vsel %vm1427, %v1429, %v1425
        %v1431 = vrcp.pop %v1361
        %v1432 = vmul.f32 %v1361, %v1431
        %v1433 = vsub.f32 1.0, %v1432
        %v1434 = vmul.f32 %v1431, %v1433
        %v1435 = vadd.f32 %v1431, %v1434
        %vm1436 = vweird.f32 %v1361
        %vm1437 = vweird.f32 %v1431
        %vm1438 = vmor %vm1436, %vm1437
        %v1439 = vsel %vm1438, %v1431, %v1435
        %v1440 = vand.u32 2147483647, %v1361
        %vm1441 = vcmp.eq.f32.partialorder %v1440, 8.507059e+37
        %v1442 = vand.u32 %v1361, 2147483648
        %v1443 = vor.u32 1.1754944e-38, %v1442
        %v1444 = vsel %vm1441, %v1443, %v1439
        %v1445 = vrcp.pop %v1362
        %v1446 = vmul.f32 %v1362, %v1445
        %v1447 = vsub.f32 1.0, %v1446
        %v1448 = vmul.f32 %v1445, %v1447
        %v1449 = vadd.f32 %v1445, %v1448
        %vm1450 = vweird.f32 %v1362
        %vm1451 = vweird.f32 %v1445
        %vm1452 = vmor %vm1450, %vm1451
        %v1453 = vsel %vm1452, %v1445, %v1449
        %v1454 = vand.u32 2147483647, %v1362
        %vm1455 = vcmp.eq.f32.partialorder %v1454, 8.507059e+37
        %v1456 = vand.u32 %v1362, 2147483648
        %v1457 = vor.u32 1.1754944e-38, %v1456
        %v1458 = vsel %vm1455, %v1457, %v1453
        %v1459 = vrcp.pop %v1363
        %v1460 = vmul.f32 %v1363, %v1459
        %v1461 = vsub.f32 1.0, %v1460
        %v1462 = vmul.f32 %v1459, %v1461
        %v1463 = vadd.f32 %v1459, %v1462
        %vm1464 = vweird.f32 %v1363
        %vm1465 = vweird.f32 %v1459
        %vm1466 = vmor %vm1464, %vm1465
        %v1467 = vsel %vm1466, %v1459, %v1463
        %v1468 = vand.u32 2147483647, %v1363
        %vm1469 = vcmp.eq.f32.partialorder %v1468, 8.507059e+37
        %v1470 = vand.u32 %v1363, 2147483648
        %v1471 = vor.u32 1.1754944e-38, %v1470
        %v1472 = vsel %vm1469, %v1471, %v1467
        %v1473 = vrcp.pop %v1364
        %v1474 = vmul.f32 %v1364, %v1473
        %v1475 = vsub.f32 1.0, %v1474
        %v1476 = vmul.f32 %v1473, %v1475
        %v1477 = vadd.f32 %v1473, %v1476
        %vm1478 = vweird.f32 %v1364
        %vm1479 = vweird.f32 %v1473
        %vm1480 = vmor %vm1478, %vm1479
        %v1481 = vsel %vm1480, %v1473, %v1477
        %v1482 = vand.u32 2147483647, %v1364
        %vm1483 = vcmp.eq.f32.partialorder %v1482, 8.507059e+37
        %v1484 = vand.u32 %v1364, 2147483648
        %v1485 = vor.u32 1.1754944e-38, %v1484
        %v1486 = vsel %vm1483, %v1485, %v1481
        %v1487 = vrcp.pop %v1365
        %v1488 = vmul.f32 %v1365, %v1487
        %v1489 = vsub.f32 1.0, %v1488
        %v1490 = vmul.f32 %v1487, %v1489
        %v1491 = vadd.f32 %v1487, %v1490
        %vm1492 = vweird.f32 %v1365
        %vm1493 = vweird.f32 %v1487
        %vm1494 = vmor %vm1492, %vm1493
        %v1495 = vsel %vm1494, %v1487, %v1491
        %v1496 = vand.u32 2147483647, %v1365
        %vm1497 = vcmp.eq.f32.partialorder %v1496, 8.507059e+37
        %v1498 = vand.u32 %v1365, 2147483648
        %v1499 = vor.u32 1.1754944e-38, %v1498
        %v1500 = vsel %vm1497, %v1499, %v1495
        %v1501 = vrcp.pop %v1321
        %v1502 = vmul.f32 %v1321, %v1501
        %v1503 = vsub.f32 1.0, %v1502
        %v1504 = vmul.f32 %v1501, %v1503
        %v1505 = vadd.f32 %v1501, %v1504
        %vm1506 = vweird.f32 %v1321
        %vm1507 = vweird.f32 %v1501
        %vm1508 = vmor %vm1506, %vm1507
        %v1509 = vsel %vm1508, %v1501, %v1505
        %v1510 = vand.u32 2147483647, %v1321
        %vm1511 = vcmp.eq.f32.partialorder %v1510, 8.507059e+37
        %v1512 = vand.u32 %v1321, 2147483648
        %v1513 = vor.u32 1.1754944e-38, %v1512
        %v1514 = vsel %vm1511, %v1513, %v1509
        %v1515 = vrcp.pop %v1322
        %v1516 = vmul.f32 %v1322, %v1515
        %v1517 = vsub.f32 1.0, %v1516
        %v1518 = vmul.f32 %v1515, %v1517
        %v1519 = vadd.f32 %v1515, %v1518
        %vm1520 = vweird.f32 %v1322
        %vm1521 = vweird.f32 %v1515
        %vm1522 = vmor %vm1520, %vm1521
        %v1523 = vsel %vm1522, %v1515, %v1519
        %v1524 = vand.u32 2147483647, %v1322
        %vm1525 = vcmp.eq.f32.partialorder %v1524, 8.507059e+37
        %v1526 = vand.u32 %v1322, 2147483648
        %v1527 = vor.u32 1.1754944e-38, %v1526
        %v1528 = vsel %vm1525, %v1527, %v1523
        %v1529 = vrcp.pop %v1323
        %v1530 = vmul.f32 %v1323, %v1529
        %v1531 = vsub.f32 1.0, %v1530
        %v1532 = vmul.f32 %v1529, %v1531
        %v1533 = vadd.f32 %v1529, %v1532
        %vm1534 = vweird.f32 %v1323
        %vm1535 = vweird.f32 %v1529
        %vm1536 = vmor %vm1534, %vm1535
        %v1537 = vsel %vm1536, %v1529, %v1533
        %v1538 = vand.u32 2147483647, %v1323
        %vm1539 = vcmp.eq.f32.partialorder %v1538, 8.507059e+37
        %v1540 = vand.u32 %v1323, 2147483648
        %v1541 = vor.u32 1.1754944e-38, %v1540
        %v1542 = vsel %vm1539, %v1541, %v1537
        %v1543 = vrcp.pop %v1324
        %v1544 = vmul.f32 %v1324, %v1543
        %v1545 = vsub.f32 1.0, %v1544
        %v1546 = vmul.f32 %v1543, %v1545
        %v1547 = vadd.f32 %v1543, %v1546
        %vm1548 = vweird.f32 %v1324
        %vm1549 = vweird.f32 %v1543
        %vm1550 = vmor %vm1548, %vm1549
        %v1551 = vsel %vm1550, %v1543, %v1547
        %v1552 = vand.u32 2147483647, %v1324
        %vm1553 = vcmp.eq.f32.partialorder %v1552, 8.507059e+37
        %v1554 = vand.u32 %v1324, 2147483648
        %v1555 = vor.u32 1.1754944e-38, %v1554
        %v1556 = vsel %vm1553, %v1555, %v1551
        %v1557 = vrcp.pop %v1325
        %v1558 = vmul.f32 %v1325, %v1557
        %v1559 = vsub.f32 1.0, %v1558
        %v1560 = vmul.f32 %v1557, %v1559
        %v1561 = vadd.f32 %v1557, %v1560
        %vm1562 = vweird.f32 %v1325
        %vm1563 = vweird.f32 %v1557
        %vm1564 = vmor %vm1562, %vm1563
        %v1565 = vsel %vm1564, %v1557, %v1561
        %v1566 = vand.u32 2147483647, %v1325
        %vm1567 = vcmp.eq.f32.partialorder %v1566, 8.507059e+37
        %v1568 = vand.u32 %v1325, 2147483648
        %v1569 = vor.u32 1.1754944e-38, %v1568
        %v1570 = vsel %vm1567, %v1569, %v1565
        %v1571 = vrcp.pop %v1326
        %v1572 = vmul.f32 %v1326, %v1571
        %v1573 = vsub.f32 1.0, %v1572
        %v1574 = vmul.f32 %v1571, %v1573
        %v1575 = vadd.f32 %v1571, %v1574
        %vm1576 = vweird.f32 %v1326
        %vm1577 = vweird.f32 %v1571
        %vm1578 = vmor %vm1576, %vm1577
        %v1579 = vsel %vm1578, %v1571, %v1575
        %v1580 = vand.u32 2147483647, %v1326
        %vm1581 = vcmp.eq.f32.partialorder %v1580, 8.507059e+37
        %v1582 = vand.u32 %v1326, 2147483648
        %v1583 = vor.u32 1.1754944e-38, %v1582
        %v1584 = vsel %vm1581, %v1583, %v1579
        %v1585 = vrcp.pop %v1327
        %v1586 = vmul.f32 %v1327, %v1585
        %v1587 = vsub.f32 1.0, %v1586
        %v1588 = vmul.f32 %v1585, %v1587
        %v1589 = vadd.f32 %v1585, %v1588
        %vm1590 = vweird.f32 %v1327
        %vm1591 = vweird.f32 %v1585
        %vm1592 = vmor %vm1590, %vm1591
        %v1593 = vsel %vm1592, %v1585, %v1589
        %v1594 = vand.u32 2147483647, %v1327
        %vm1595 = vcmp.eq.f32.partialorder %v1594, 8.507059e+37
        %v1596 = vand.u32 %v1327, 2147483648
        %v1597 = vor.u32 1.1754944e-38, %v1596
        %v1598 = vsel %vm1595, %v1597, %v1593
        %v1599 = vrcp.pop %v1328
        %v1600 = vmul.f32 %v1328, %v1599
        %v1601 = vsub.f32 1.0, %v1600
        %v1602 = vmul.f32 %v1599, %v1601
        %v1603 = vadd.f32 %v1599, %v1602
        %vm1604 = vweird.f32 %v1328
        %vm1605 = vweird.f32 %v1599
        %vm1606 = vmor %vm1604, %vm1605
        %v1607 = vsel %vm1606, %v1599, %v1603
        %v1608 = vand.u32 2147483647, %v1328
        %vm1609 = vcmp.eq.f32.partialorder %v1608, 8.507059e+37
        %v1610 = vand.u32 %v1328, 2147483648
        %v1611 = vor.u32 1.1754944e-38, %v1610
        %v1612 = vsel %vm1609, %v1611, %v1607
        %v1613 = vrcp.pop %v1329
        %v1614 = vmul.f32 %v1329, %v1613
        %v1615 = vsub.f32 1.0, %v1614
        %v1616 = vmul.f32 %v1613, %v1615
        %v1617 = vadd.f32 %v1613, %v1616
        %vm1618 = vweird.f32 %v1329
        %vm1619 = vweird.f32 %v1613
        %vm1620 = vmor %vm1618, %vm1619
        %v1621 = vsel %vm1620, %v1613, %v1617
        %v1622 = vand.u32 2147483647, %v1329
        %vm1623 = vcmp.eq.f32.partialorder %v1622, 8.507059e+37
        %v1624 = vand.u32 %v1329, 2147483648
        %v1625 = vor.u32 1.1754944e-38, %v1624
        %v1626 = vsel %vm1623, %v1625, %v1621
        %v1627 = vmul.f32 %v1388, %v1514
        %v1628 = vmul.f32 %v1402, %v1528
        %v1629 = vmul.f32 %v1416, %v1542
        %v1630 = vmul.f32 %v1430, %v1556
        %v1631 = vmul.f32 %v1444, %v1570
        %v1632 = vmul.f32 %v1458, %v1584
        %v1633 = vmul.f32 %v1472, %v1598
        %v1634 = vmul.f32 %v1486, %v1612
        %v1635 = vmul.f32 %v1500, %v1626
        %v1636 = vmul.f32 %v1366, %v1627
        %v1637 = vmul.f32 %v1367, %v1628
        %v1638 = vmul.f32 %v1368, %v1629
        %v1639 = vmul.f32 %v1369, %v1630
        %v1640 = vmul.f32 %v1370, %v1631
        %v1641 = vmul.f32 %v1371, %v1632
        %v1642 = vmul.f32 %v1372, %v1633
        %v1643 = vmul.f32 %v1373, %v1634
        %v1644 = vmul.f32 %v1374, %v1635
        %1654 = vst [vmem:[#allocation1] ss:$4 sm:$0xff] %v1636
        %s1655 = scalar_lea.vmem [#allocation1], 1
        %1656 = vst [vmem:[%s1655] ss:$4 sm:$0xff] %v1637
        %s1657 = scalar_lea.vmem [#allocation1], 2
        %1658 = vst [vmem:[%s1657] ss:$4 sm:$0xff] %v1638
        %v1659 = vld.sshfl [vmem:[#allocation1] sm:$0xff pattern:$0x73625140]
        %s1660 = scalar_lea.vmem [#allocation1], 32
        %1661 = vst [vmem:[%s1660] ss:$4 sm:$0xff] %v1639
        %s1662 = scalar_lea.vmem [#allocation1], 33
        %1663 = vst [vmem:[%s1662] ss:$4 sm:$0xff] %v1640
        %s1664 = scalar_lea.vmem [#allocation1], 34
        %1665 = vst [vmem:[%s1664] ss:$4 sm:$0xff] %v1641
        %v1666 = vld.sshfl [vmem:[#allocation1 + $0x20] sm:$0xff pattern:$0x73625140]
        %1667 = vst [vmem:[#allocation1] ss:$4 sm:$0xff] %v1642
        %1668 = vst [vmem:[%s1655] ss:$4 sm:$0xff] %v1643
        %1669 = vst [vmem:[%s1657] ss:$4 sm:$0xff] %v1644
        %v1670 = vld.sshfl [vmem:[#allocation1] sm:$0xff pattern:$0x73625140]
        %vm1674 = vcmask 46080
        %v1675 = vsel %vm1674, %v1659, 0.0
        %v1676 = vsel %vm1674, %v1666, 0.0
        %v1677 = vadd.f32 %v1675, %v1676
        %v1678 = vsel %vm1674, %v1670, 0.0
        %v1679 = vadd.f32 %v1677, %v1678
        %1680 = vadd.xlane.f32.xlu0 %v1679
        %v1681 = vpop.xlane.xlu0 %1680
        %v1682 = vrot.slane %v1681, 4
        %v1683 = vadd.f32 %v1681, %v1682
        %v1684 = vrot.slane %v1683, 2
        %v1685 = vadd.f32 %v1683, %v1684
        %v1686 = vrot.slane %v1685, 1
        %v1687 = vadd.f32 %v1685, %v1686
        %s1688 = vtos %v1687
        %v1689 = vstv %s1688
        %1690 = vst [vmem:[%s260] sm:$0x1] %v1689
        %s1691 = sand.u32 %s126, 1
        %s1692 = scalar_lea.sflag [#allocation4], %s1691
        %s1693 = sand.u32 %s126, 1
        %s1694 = scalar_lea.vmem [#allocation7], %s1693
        // Predicated region
        $region45: #{tpu_custom_call.1} parent=35 // pred_check
          %p1695 = pneg %p136
        $region46: #{tpu_custom_call.1} parent=35 // pred_check_branch
          %1697 = sbr.rel (%p1695) target = $region48
        $region47: #{tpu_custom_call.1} parent=35 // pred_region
          %1699 = vsyncadd %s1692, 0
          %s1700 = scalar_lea.hbm %s4, %s24
          %s1702 = sshll.u32 %s1694, 4
          %s1703 = int_to_ptr.vmem [resolvable:$true] %s1702
          %s1704 = sshll.u32 %s1700, 4
          %s1705 = int_to_ptr.hbm [resolvable:$true] %s1704
          %1707 = dma.vmem_to_hbm [thread:$0]  %s1703, 16, %s1705, %s1692
        $region48: #{tpu_custom_call.1} parent=35 // pred_fallthru
          _
      $region36: #{tpu_custom_call.1} parent=5 // pred_fallthru
        _
      %p1708 = scmp.le.s32.totalorder 2, %s19
      // Predicated region
      $region49: #{tpu_custom_call.1} parent=5 // pred_check
        %p1709 = pneg %p1708
      $region50: #{tpu_custom_call.1} parent=5 // pred_check_branch
        %1711 = sbr.rel (%p1709) target = $region52
      $region51: #{tpu_custom_call.1} parent=5 // pred_region
        %s1712 = ssub.s32 %s19, 2
        // Predicated region
        $region53: #{tpu_custom_call.1} parent=51 // pred_check
          %p1713 = pneg %p142
        $region54: #{tpu_custom_call.1} parent=51 // pred_check_branch
          %1715 = sbr.rel (%p1713) target = $region56
        $region55: #{tpu_custom_call.1} parent=51 // pred_region
          %s1716 = sand.u32 %s127, 1
          %s1717 = scalar_lea.sflag [#allocation4], %s1716
          %s1718 = sand.u32 %s127, 1
          %s1719 = scalar_lea.vmem [#allocation7], %s1718
          %1721 = dma.done %s1717, 16
        $region56: #{tpu_custom_call.1} parent=51 // pred_fallthru
          _
      $region52: #{tpu_custom_call.1} parent=5 // pred_fallthru
        _
    $region6: #{tpu_custom_call.1} parent=1 // loop_footer
      %s23 = sadd.s32 1, %s19
    $region7: #{tpu_custom_call.1} parent=1 // loop_footer_branch
      %18 = sbr.rel target = $region3
    $region8: #{tpu_custom_call.1} parent=1 // loop_exit
      _
    %1722 = vsyncpa [#allocation3], 1
    %s1723 = scalar_lea.sflag [#allocation3], 1
    %1724 = vsyncpa %s1723, 1
    %1725 = vsyncpa [#allocation6], 1
    %s1726 = scalar_lea.sflag [#allocation6], 1
    %1727 = vsyncpa %s1726, 1
    %1728 = vsyncpa [#allocation4], 1
    %s1729 = scalar_lea.sflag [#allocation4], 1
    %1730 = vsyncpa %s1729, 1

</llo_original>
